<compile_context>
chip_gen: v6e
topology: v6e:2x2x1
jax: 0.10.0
libtpu: 0.0.40
codegen_flags: <defaults>
</compile_context>

<pallas_src>
import jax
import jax.numpy as jnp
from jax.experimental import pallas as pl
from jax.experimental.pallas import tpu as pltpu


def _sigmoid(v):
    # exp rides the EUP; ca/sa are pooled (Nb,C)/(Nb,HW) tensors, so the exact
    # divide costs nothing — kept exact to stay well inside the test tolerance.
    return 1.0 / (1.0 + jnp.exp(-v))


def _make_cbam_kernel(hw_valid: int, hw_padded: int):
    """Build the kernel closure over the real / padded spatial extents."""
    inv_hw = 1.0 / float(hw_valid)
    needs_mask = hw_padded != hw_valid
    hi = jax.lax.Precision.HIGHEST

    def kernel(x_ref, w1t_ref, w2t_ref, m_ref, out_ref):
        # x_ref:   (Nb, C, HWp)   input block (native dtype)
        # w1t_ref: (C, Chp)       1x1 conv C -> C//ratio, transposed, zero-padded
        # w2t_ref: (Chp, C)       1x1 conv C//ratio -> C, transposed, zero-padded
        # m_ref:   (2*HWp, HWp)   dense 7x7 spatial conv operator
        # out_ref: (Nb, C, HWp)
        nb = x_ref.shape[0]
        x = x_ref[...]                                        # native dtype

        # ---- Channel attention: avg/max pool over HW + shared MLP + sigmoid ----
        avg = jnp.sum(x.astype(jnp.float32), axis=2) * inv_hw      # (Nb, C)
        if needs_mask:
            lane = jax.lax.broadcasted_iota(jnp.int32, x.shape, 2)
            x_for_max = jnp.where(lane < hw_valid, x,
                                  jnp.asarray(-jnp.inf, x.dtype))
        else:
            x_for_max = x
        mx = jnp.max(x_for_max, axis=2).astype(jnp.float32)        # (Nb, C)

        stacked = jnp.concatenate([avg, mx], axis=0)               # (2*Nb, C)
        # Tiny matmuls: keep HIGHEST (exact ca, negligible MXU cost).
        hidden = jnp.maximum(
            jnp.dot(stacked, w1t_ref[...],
                    preferred_element_type=jnp.float32, precision=hi), 0.0)
        pre = jnp.dot(hidden, w2t_ref[...],
                      preferred_element_type=jnp.float32, precision=hi)
        ca = _sigmoid(pre[:nb] + pre[nb:])                         # (Nb, C) f32
        ca = ca.astype(x.dtype)[:, :, None]                        # (Nb, C, 1)

        # ---- Spatial attention: channel mean/max of (x*ca) + 7x7 conv ----
        # `g` is only used for the two reductions; the store recomputes x*ca*sa
        # so no full-block temporary has to stay live across the matmul.
        g = x * ca                                                 # (Nb, C, HWp)
        mean_c = jnp.mean(g.astype(jnp.float32), axis=1)           # (Nb, HWp)
        max_c = jnp.max(g, axis=1).astype(jnp.float32)             # (Nb, HWp)
        s = jnp.concatenate([mean_c, max_c], axis=1)               # (Nb, 2*HWp)
        # Dominant matmul: DEFAULT precision (bf16 operands, f32 accumulate) —
        # ~3-6x less MXU work than HIGHEST; error << sigmoid-gated tolerance.
        conv = jnp.dot(s, m_ref[...], preferred_element_type=jnp.float32)
        sa = _sigmoid(conv).astype(x.dtype)[:, None, :]            # (Nb, 1, HWp)

        out_ref[...] = (x * (ca * sa)).astype(out_ref.dtype)

    return kernel


def _spatial_conv_matrix(wsa, H, W):
    """Expand the (2-in, 1-out, KxK, pad=(K-1)//2, no-bias) conv into a dense
    (2*H*W, H*W) operator M such that conv(s).reshape(H*W) == s.reshape(2*H*W) @ M
    for zero-padded cross-correlation (PyTorch Conv2d semantics)."""
    K = wsa.shape[-1]
    pad = (K - 1) // 2
    w = jnp.asarray(wsa, jnp.float32)[0]                    # (2, K, K)
    i = jnp.arange(H)[:, None]
    p = jnp.arange(H)[None, :]
    j = jnp.arange(W)[:, None]
    q = jnp.arange(W)[None, :]
    dh = i - p + pad                                        # (H, H): kh index
    dw = j - q + pad                                        # (W, W): kw index
    vh = (dh >= 0) & (dh < K)
    vw = (dw >= 0) & (dw < K)
    kh = jnp.clip(dh, 0, K - 1)
    kw = jnp.clip(dw, 0, K - 1)
    m = w[:, kh[:, None, :, None], kw[None, :, None, :]]    # (2, H, W, H, W)
    mask = (vh[:, None, :, None] & vw[None, :, None, :])[None, ...]
    m = m * mask.astype(jnp.float32)
    return m.reshape(2 * H * W, H * W)


def cbam_pallas(x, w1, w2, wsa, *, batch_block=None, vmem_limit_bytes=None):
    N, C, H, W = x.shape
    HW = H * W
    HWp = max(128, ((HW + 127) // 128) * 128)               # lane-dense spatial dim
    Ch = w1.shape[0]
    Chp = max(8, ((Ch + 7) // 8) * 8)                       # hidden dim >= 8 lanes
    itemsize = jnp.dtype(x.dtype).itemsize

    # ---- expand / pad weights once in the wrapper ----
    w1t = jnp.zeros((C, Chp), jnp.float32).at[:, :Ch].set(jnp.asarray(w1, jnp.float32).T)
    w2t = jnp.zeros((Chp, C), jnp.float32).at[:Ch, :].set(jnp.asarray(w2, jnp.float32).T)
    m_small = _spatial_conv_matrix(wsa, H, W)               # (2*HW, HW)
    if HWp == HW:
        m = m_small
    else:
        m = jnp.zeros((2 * HWp, HWp), jnp.float32)
        m = m.at[:HW, :HW].set(m_small[:HW])
        m = m.at[HWp:HWp + HW, :HW].set(m_small[HW:])

    # ---- generation-aware VMEM budget ----
    try:
        info = pltpu.get_tpu_info()
        vmem_cap = getattr(info, "vmem_capacity_bytes", None) or (64 << 20)
    except Exception:
        vmem_cap = 64 << 20                                  # assume smallest (v7x)
    small_vmem = vmem_cap <= (64 << 20)
    if vmem_limit_bytes is None:
        vmem_limit_bytes = (48 << 20) if small_vmem else (64 << 20)
    target_block_bytes = (4 << 20) if small_vmem else (8 << 20)

    # Grid-invariant operands (pipeline double-buffers them).
    const_bytes = 2 * 4 * (2 * HWp * HWp + C * Chp + Chp * C)
    if const_bytes > vmem_limit_bytes // 2:
        # TODO(synk): tile the dense spatial operator over output-HW columns (or
        # switch to a K=98 im2col contraction) for large feature maps.
        raise NotImplementedError(
            f"dense 7x7 spatial operator ({const_bytes / 2**20:.1f} MiB "
            f"double-buffered) does not fit the VMEM budget (HW={HW}).")

    # Per-batch-row VMEM: double-buffered in + out blocks plus ~3 in-kernel
    # full-block temporaries (x*ca, ca*sa product, reduction source).
    row_bytes = 4 * C * HWp * itemsize + 3 * C * HWp * max(itemsize, 4)
    avail = int(0.8 * (vmem_limit_bytes - const_bytes))
    nb_cap_vmem = max(1, avail // row_bytes)
    nb_cap_block = max(1, target_block_bytes // (C * HWp * itemsize))
    nb_cap_grid = max(1, -(-N // 2))        # keep >= 2 grid steps (megacore on v7x)
    if batch_block is None:
        nb = max(1, min(nb_cap_vmem, nb_cap_block, nb_cap_grid, N))
    else:
        nb = max(1, min(int(batch_block), N))

    grid_n = -(-N // nb)                    # cdiv: non-divisor / prime N handled
    Np = grid_n * nb

    x3 = x.reshape(N, C, HW)                # free view of NCHW
    if Np != N or HWp != HW:
        x3 = jnp.pad(x3, ((0, Np - N), (0, 0), (0, HWp - HW)))

    kernel = _make_cbam_kernel(HW, HWp)
    out3 = pl.pallas_call(
        kernel,
        out_shape=jax.ShapeDtypeStruct((Np, C, HWp), x.dtype),
        grid=(grid_n,),
        in_specs=[
            pl.BlockSpec((nb, C, HWp), lambda n: (n, 0, 0)),
            pl.BlockSpec((C, Chp), lambda n: (0, 0)),
            pl.BlockSpec((Chp, C), lambda n: (0, 0)),
            pl.BlockSpec((2 * HWp, HWp), lambda n: (0, 0)),
        ],
        out_specs=pl.BlockSpec((nb, C, HWp), lambda n: (n, 0, 0)),
        compiler_params=pltpu.CompilerParams(
            dimension_semantics=("parallel",),
            vmem_limit_bytes=vmem_limit_bytes,
        ),
    )(x3, w1t, w2t, m)

    out3 = out3[:N, :, :HW]
    return out3.reshape(N, C, H, W)


def cbam_reference(x, w1, w2, wsa):
    # Pure-JAX reference mirroring the PyTorch forward (f32, HIGHEST precision).
    hp = jax.lax.Precision.HIGHEST
    avg = x.mean(axis=(2, 3))                               # (N, C)
    mx = x.max(axis=(2, 3))                                 # (N, C)

    def mlp(v):
        h = jnp.maximum(jnp.dot(v, w1.T, precision=hp), 0.0)
        return jnp.dot(h, w2.T, precision=hp)

    ca = jax.nn.sigmoid(mlp(avg) + mlp(mx))                 # (N, C)
    out = x * ca[:, :, None, None]

    mean_c = out.mean(axis=1, keepdims=True)
    max_c = out.max(axis=1, keepdims=True)
    s = jnp.concatenate([mean_c, max_c], axis=1)            # (N, 2, H, W)
    conv = jax.lax.conv_general_dilated(
        s, wsa, window_strides=(1, 1), padding=[(3, 3), (3, 3)],
        dimension_numbers=("NCHW", "OIHW", "NCHW"), precision=hp)
    sa = jax.nn.sigmoid(conv)                               # (N, 1, H, W)
    return out * sa


if __name__ == "__main__":
    N, C, H, W = 2, 32, 16, 16
    ratio = 16
    Ch = C // ratio                                         # 2

    key = jax.random.PRNGKey(0)
    k0, k1, k2, k3 = jax.random.split(key, 4)
    x = jax.random.normal(k0, (N, C, H, W), jnp.float32)
    w1 = jax.random.normal(k1, (Ch, C), jnp.float32) * 0.1   # Conv2d(C, C//r, 1, bias=False)
    w2 = jax.random.normal(k2, (C, Ch), jnp.float32) * 0.1   # Conv2d(C//r, C, 1, bias=False)
    wsa = jax.random.normal(k3, (1, 2, 7, 7), jnp.float32) * 0.1  # Conv2d(2, 1, 7, pad=3, bias=False)

    out = cbam_pallas(x, w1, w2, wsa)
    out = jax.block_until_ready(out)

    ref = cbam_reference(x, w1, w2, wsa)
    assert out.shape == (N, C, H, W)
    # Tolerance accounts for DEFAULT (bf16-operand / f32-accumulate) precision on
    # the 98-tap spatial conv matmul; structural errors would be orders larger.
    max_err = float(jnp.max(jnp.abs(out - ref)))
    assert jnp.allclose(out, ref, atol=5e-3, rtol=5e-3), \
        f"mismatch vs reference (max abs err {max_err})"

    print("KERNEL_OK")
</pallas_src>

<mosaic_0001>
module attributes {stable_mosaic.version = 11 : i64} {
  func.func @kernel(%arg0: i32, %arg1: memref<1x32x256xf32, #tpu.memory_space<vmem>>, %arg2: memref<32x8xf32, #tpu.memory_space<vmem>>, %arg3: memref<8x32xf32, #tpu.memory_space<vmem>>, %arg4: memref<512x256xf32, #tpu.memory_space<vmem>>, %arg5: memref<1x32x256xf32, #tpu.memory_space<vmem>>) attributes {dimension_semantics = [#tpu.dimension_semantics<parallel>], iteration_bounds = array<i64: 2>, scalar_prefetch = 0 : i64, scratch_operands = 0 : i64, tpu.core_type = #tpu.core_type<tc>, window_params = [{transform_indices = @transform_0, window_bounds = array<i64: 1, 32, 256>}, {pipeline_mode = #tpu.pipeline_mode<synchronous>, transform_indices = @transform_1, window_bounds = array<i64: 32, 8>}, {pipeline_mode = #tpu.pipeline_mode<synchronous>, transform_indices = @transform_2, window_bounds = array<i64: 8, 32>}, {pipeline_mode = #tpu.pipeline_mode<synchronous>, transform_indices = @transform_3, window_bounds = array<i64: 512, 256>}, {transform_indices = @transform_4, window_bounds = array<i64: 1, 32, 256>}]} {
    %c0 = arith.constant 0 : index
    %c0_0 = arith.constant 0 : index
    %c0_1 = arith.constant 0 : index
    %0 = vector.load %arg1[%c0, %c0_0, %c0_1] : memref<1x32x256xf32, #tpu.memory_space<vmem>>, vector<1x32x256xf32>
    %cst = arith.constant dense<0.000000e+00> : vector<1x32xf32>
    %1 = vector.multi_reduction <add>, %0, %cst [2] : vector<1x32x256xf32> to vector<1x32xf32>
    %cst_2 = arith.constant 3.906250e-03 : f32
    %2 = vector.broadcast %cst_2 : f32 to vector<1x32xf32>
    %3 = arith.mulf %1, %2 : vector<1x32xf32>
    %cst_3 = arith.constant dense<0xFF800000> : vector<1x32xf32>
    %4 = vector.multi_reduction <maximumf>, %0, %cst_3 [2] : vector<1x32x256xf32> to vector<1x32xf32>
    %5 = tpu.concatenate %3, %4 in 0 : vector<1x32xf32>, vector<1x32xf32> -> vector<2x32xf32>
    %c0_4 = arith.constant 0 : index
    %c0_5 = arith.constant 0 : index
    %6 = vector.load %arg2[%c0_4, %c0_5] : memref<32x8xf32, #tpu.memory_space<vmem>>, vector<32x8xf32>
    %cst_6 = arith.constant dense<0.000000e+00> : vector<2x8xf32>
    %7 = tpu.matmul %5, %6, %cst_6 {dimension_numbers = #tpu.dot_dimension_numbers<[1], [0], [0], [1], [0, 0, 1, 1], [], []>, precision = #tpu.contract_precision<fp32>} : vector<2x32xf32>, vector<32x8xf32>, vector<2x8xf32> -> vector<2x8xf32>
    %cst_7 = arith.constant 0.000000e+00 : f32
    %8 = vector.broadcast %cst_7 : f32 to vector<2x8xf32>
    %9 = arith.maximumf %7, %8 : vector<2x8xf32>
    %c0_8 = arith.constant 0 : index
    %c0_9 = arith.constant 0 : index
    %10 = vector.load %arg3[%c0_8, %c0_9] : memref<8x32xf32, #tpu.memory_space<vmem>>, vector<8x32xf32>
    %cst_10 = arith.constant dense<0.000000e+00> : vector<2x32xf32>
    %11 = tpu.matmul %9, %10, %cst_10 {dimension_numbers = #tpu.dot_dimension_numbers<[1], [0], [0], [1], [0, 0, 1, 1], [], []>, precision = #tpu.contract_precision<fp32>} : vector<2x8xf32>, vector<8x32xf32>, vector<2x32xf32> -> vector<2x32xf32>
    %12 = vector.extract_strided_slice %11 {offsets = [0, 0], sizes = [1, 32], strides = [1, 1]} : vector<2x32xf32> to vector<1x32xf32>
    %13 = vector.extract_strided_slice %11 {offsets = [1, 0], sizes = [1, 32], strides = [1, 1]} : vector<2x32xf32> to vector<1x32xf32>
    %14 = arith.addf %12, %13 : vector<1x32xf32>
    %cst_11 = arith.constant 0.000000e+00 : f32
    %15 = vector.broadcast %cst_11 : f32 to vector<1x32xf32>
    %16 = arith.subf %15, %14 : vector<1x32xf32>
    %17 = math.exp %16 : vector<1x32xf32>
    %cst_12 = arith.constant 1.000000e+00 : f32
    %18 = vector.broadcast %cst_12 : f32 to vector<1x32xf32>
    %19 = arith.addf %18, %17 : vector<1x32xf32>
    %cst_13 = arith.constant 1.000000e+00 : f32
    %20 = vector.broadcast %cst_13 : f32 to vector<1x32xf32>
    %21 = arith.divf %20, %19 : vector<1x32xf32>
    %22 = vector.shape_cast %21 : vector<1x32xf32> to vector<1x32x1xf32>
    %23 = vector.broadcast %22 : vector<1x32x1xf32> to vector<1x32x256xf32>
    %24 = arith.mulf %0, %23 : vector<1x32x256xf32>
    %cst_14 = arith.constant dense<0.000000e+00> : vector<1x256xf32>
    %25 = vector.multi_reduction <add>, %24, %cst_14 [1] : vector<1x32x256xf32> to vector<1x256xf32>
    %cst_15 = arith.constant 3.200000e+01 : f32
    %26 = vector.broadcast %cst_15 : f32 to vector<1x256xf32>
    %27 = arith.divf %25, %26 : vector<1x256xf32>
    %cst_16 = arith.constant dense<0xFF800000> : vector<1x256xf32>
    %28 = vector.multi_reduction <maximumf>, %24, %cst_16 [1] : vector<1x32x256xf32> to vector<1x256xf32>
    %29 = tpu.concatenate %27, %28 in 1 : vector<1x256xf32>, vector<1x256xf32> -> vector<1x512xf32>
    %c0_17 = arith.constant 0 : index
    %c0_18 = arith.constant 0 : index
    %30 = vector.load %arg4[%c0_17, %c0_18] : memref<512x256xf32, #tpu.memory_space<vmem>>, vector<512x256xf32>
    %cst_19 = arith.constant dense<0.000000e+00> : vector<1x256xf32>
    %31 = tpu.matmul %29, %30, %cst_19 {dimension_numbers = #tpu.dot_dimension_numbers<[1], [0], [0], [1], [0, 0, 1, 1], [], []>} : vector<1x512xf32>, vector<512x256xf32>, vector<1x256xf32> -> vector<1x256xf32>
    %cst_20 = arith.constant 0.000000e+00 : f32
    %32 = vector.broadcast %cst_20 : f32 to vector<1x256xf32>
    %33 = arith.subf %32, %31 : vector<1x256xf32>
    %34 = math.exp %33 : vector<1x256xf32>
    %cst_21 = arith.constant 1.000000e+00 : f32
    %35 = vector.broadcast %cst_21 : f32 to vector<1x256xf32>
    %36 = arith.addf %35, %34 : vector<1x256xf32>
    %cst_22 = arith.constant 1.000000e+00 : f32
    %37 = vector.broadcast %cst_22 : f32 to vector<1x256xf32>
    %38 = arith.divf %37, %36 : vector<1x256xf32>
    %39 = vector.shape_cast %38 : vector<1x256xf32> to vector<1x1x256xf32>
    %40 = vector.broadcast %22 : vector<1x32x1xf32> to vector<1x32x256xf32>
    %41 = vector.broadcast %39 : vector<1x1x256xf32> to vector<1x32x256xf32>
    %42 = arith.mulf %40, %41 : vector<1x32x256xf32>
    %43 = arith.mulf %0, %42 : vector<1x32x256xf32>
    %c0_23 = arith.constant 0 : index
    %c0_24 = arith.constant 0 : index
    %c0_25 = arith.constant 0 : index
    %44 = vector.load %arg5[%c0_23, %c0_24, %c0_25] : memref<1x32x256xf32, #tpu.memory_space<vmem>>, vector<1x32x256xf32>
    tpu.vector_store %arg5[%c0_23, %c0_24, %c0_25], %43 {strides = array<i32>} : memref<1x32x256xf32, #tpu.memory_space<vmem>>, vector<1x32x256xf32>,
    return
  }
  func.func @transform_0(%arg0: i32) -> (i32, i32, i32) {
    %c0_i32 = arith.constant 0 : i32
    %c0_i32_0 = arith.constant 0 : i32
    %c0_i32_1 = arith.constant 0 : i32
    return %arg0, %c0_i32, %c0_i32_0 : i32, i32, i32
  }
  func.func @transform_1(%arg0: i32) -> (i32, i32) {
    %c0_i32 = arith.constant 0 : i32
    %c0_i32_0 = arith.constant 0 : i32
    %c0_i32_1 = arith.constant 0 : i32
    return %c0_i32, %c0_i32_0 : i32, i32
  }
  func.func @transform_2(%arg0: i32) -> (i32, i32) {
    %c0_i32 = arith.constant 0 : i32
    %c0_i32_0 = arith.constant 0 : i32
    %c0_i32_1 = arith.constant 0 : i32
    return %c0_i32, %c0_i32_0 : i32, i32
  }
  func.func @transform_3(%arg0: i32) -> (i32, i32) {
    %c0_i32 = arith.constant 0 : i32
    %c0_i32_0 = arith.constant 0 : i32
    %c0_i32_1 = arith.constant 0 : i32
    return %c0_i32, %c0_i32_0 : i32, i32
  }
  func.func @transform_4(%arg0: i32) -> (i32, i32, i32) {
    %c0_i32 = arith.constant 0 : i32
    %c0_i32_0 = arith.constant 0 : i32
    %c0_i32_1 = arith.constant 0 : i32
    return %arg0, %c0_i32, %c0_i32_0 : i32, i32, i32
  }
}

</mosaic_0001>

<llo_original>
// kernel: tpu_custom_call.1
$region0: #{tpu_custom_call.1}
  #allocation0 [shape = 'u32[]', space=smem, size = 0x4, offset = 0x4, fixed_abs, tag = 'smem constant byte address 0x4 - core index']
  #allocation1 [shape = 'u32[144,128]{1,0:T(1,128)}', space=vmem, size = 0x12000, scoped, tag = 'internal scratch']
  %s0 = inlined_call_operand.hbm [shape: f32[2,32,256], index: 0, kind: input, shape index: {}]
  %s1 = inlined_call_operand.vmem [shape: f32[32,8], index: 1, kind: input, shape index: {}]
  %s2 = inlined_call_operand.vmem [shape: f32[8,32], index: 2, kind: input, shape index: {}]
  %s3 = inlined_call_operand.hbm [shape: f32[512,256], index: 3, kind: input, shape index: {}]
  %s4 = inlined_call_operand.hbm [shape: f32[2,32,256], index: 4, kind: output, shape index: {}]
  %s5 = sld [smem:[#allocation0]]
  $region57: #{tpu_custom_call.1} parent=0
    _
  %s7 = ssub.s32 1, %s5
  %s8 = scalar_select 0, %s7, %s5
  $region1: #{tpu_custom_call.1} parent=0
    #allocation2 [shape = 'u8[65536]{0}', space=vmem, size = 0x10000, scoped, tag = 'input window, operand 0']
    #allocation3 [shape = 's32[2]{0}', space=sflag, size = 0x8, scoped, tag = 'scoped memory for tpu_custom_call.1']
    #allocation4 [shape = 's32[2]{0}', space=sflag, size = 0x8, scoped, tag = 'scoped memory for tpu_custom_call.1']
    #allocation5 [shape = 'u8[524288]{0}', space=vmem, size = 0x80000, scoped, tag = 'input window, operand 3, single buffered']
    #allocation6 [shape = 's32[1]{0}', space=sflag, size = 0x4, scoped, tag = 'scoped memory for tpu_custom_call.1']
    #allocation7 [shape = 'u8[65536]{0}', space=vmem, size = 0x10000, scoped, tag = 'output window, operand 0']
    %9 = vsyncpa [#allocation3], 0
    %s10 = scalar_lea.sflag [#allocation3], 1
    %11 = vsyncpa %s10, 0
    %12 = vsyncpa [#allocation6], 0
    %13 = vsyncpa [#allocation4], 0
    %s14 = scalar_lea.sflag [#allocation4], 1
    %15 = vsyncpa %s14, 0
    loop: start=0, step=1, limit=4
    $region2: #{tpu_custom_call.1} parent=1 // loop_pre_header
      _
    $region3: #{tpu_custom_call.1} parent=1 // loop_header
      %s17 = sphi 0, %s21
      %p18 = scmp.ge.s32.totalorder %s17, 4
      %s27 = sphi 0, %s29
      %s30 = sphi 0, %s27
      %s31 = sphi 0, %s30
      %s47 = sphi 0, %s31
      %s51 = sphi 0, %s51
      %s53 = sphi 0, %s51
      %s54 = sphi 0, %s53
      %s68 = sphi 0, %s54
      %s72 = sphi 0, %s72
      %s74 = sphi 0, %s72
      %s75 = sphi 0, %s74
      %s89 = sphi 0, %s75
      %s93 = sphi 0, %s93
      %s95 = sphi 0, %s93
      %s96 = sphi 0, %s95
      %s110 = sphi 0, %s96
      %s116 = sphi 0, %s118
      %s119 = sphi 0, %s116
      %s120 = sphi 0, %s119
      %s136 = sphi 0, %s120
    $region4: #{tpu_custom_call.1} parent=1 // loop_header_branch
      %20 = sbr.rel (%p18) target = $region8
    $region5: #{tpu_custom_call.1} parent=1 // loop_body
      %s22 = ssub.s32 %s17, 1
      %s23 = ssub.s32 %s17, 2
      %s24 = sadd.s32 %s17, 1
      %s25 = ssub.s32 %s17, %s24
      %p26 = scmp.eq.s32.totalorder %s25, 0
      %s28 = sadd.s32 %s27, 1
      %s29 = scalar_select %p26, %s27, %s28
      %p32 = pneg %p26
      %p33 = scmp.eq.s32.totalorder %s17, 1
      %p34 = por %p32, %p33
      %p35 = scmp.ne.s32.totalorder %s27, %s30
      %p36 = scmp.eq.s32.totalorder %s17, 0
      %p37 = por %p35, %p36
      %p38 = scmp.ne.s32.totalorder %s27, %s30
      %p39 = scmp.eq.s32.totalorder %s22, 1
      %p40 = por %p38, %p39
      %p41 = scmp.ne.s32.totalorder %s30, %s31
      %p42 = scmp.eq.s32.totalorder %s22, 0
      %p43 = por %p41, %p42
      %p44 = scmp.ne.s32.totalorder %s30, %s31
      %p45 = scmp.eq.s32.totalorder %s23, 1
      %p46 = por %p44, %p45
      %p48 = scmp.ne.s32.totalorder %s31, %s47
      %p49 = scmp.eq.s32.totalorder %s23, 0
      %p50 = por %p48, %p49
      %s52 = sadd.s32 %s51, 1
      %p55 = scmp.eq.s32.totalorder %s17, 1
      %p56 = scmp.ne.s32.totalorder %s51, %s53
      %p57 = scmp.eq.s32.totalorder %s17, 0
      %p58 = por %p56, %p57
      %p59 = scmp.ne.s32.totalorder %s51, %s53
      %p60 = scmp.eq.s32.totalorder %s22, 1
      %p61 = por %p59, %p60
      %p62 = scmp.ne.s32.totalorder %s53, %s54
      %p63 = scmp.eq.s32.totalorder %s22, 0
      %p64 = por %p62, %p63
      %p65 = scmp.ne.s32.totalorder %s53, %s54
      %p66 = scmp.eq.s32.totalorder %s23, 1
      %p67 = por %p65, %p66
      %p69 = scmp.ne.s32.totalorder %s54, %s68
      %p70 = scmp.eq.s32.totalorder %s23, 0
      %p71 = por %p69, %p70
      %s73 = sadd.s32 %s72, 1
      %p76 = scmp.eq.s32.totalorder %s17, 1
      %p77 = scmp.ne.s32.totalorder %s72, %s74
      %p78 = scmp.eq.s32.totalorder %s17, 0
      %p79 = por %p77, %p78
      %p80 = scmp.ne.s32.totalorder %s72, %s74
      %p81 = scmp.eq.s32.totalorder %s22, 1
      %p82 = por %p80, %p81
      %p83 = scmp.ne.s32.totalorder %s74, %s75
      %p84 = scmp.eq.s32.totalorder %s22, 0
      %p85 = por %p83, %p84
      %p86 = scmp.ne.s32.totalorder %s74, %s75
      %p87 = scmp.eq.s32.totalorder %s23, 1
      %p88 = por %p86, %p87
      %p90 = scmp.ne.s32.totalorder %s75, %s89
      %p91 = scmp.eq.s32.totalorder %s23, 0
      %p92 = por %p90, %p91
      %s94 = sadd.s32 %s93, 1
      %p97 = scmp.eq.s32.totalorder %s17, 1
      %p98 = scmp.ne.s32.totalorder %s93, %s95
      %p99 = scmp.eq.s32.totalorder %s17, 0
      %p100 = por %p98, %p99
      %p101 = scmp.ne.s32.totalorder %s93, %s95
      %p102 = scmp.eq.s32.totalorder %s22, 1
      %p103 = por %p101, %p102
      %p104 = scmp.ne.s32.totalorder %s95, %s96
      %p105 = scmp.eq.s32.totalorder %s22, 0
      %p106 = por %p104, %p105
      %p107 = scmp.ne.s32.totalorder %s95, %s96
      %p108 = scmp.eq.s32.totalorder %s23, 1
      %p109 = por %p107, %p108
      %p111 = scmp.ne.s32.totalorder %s96, %s110
      %p112 = scmp.eq.s32.totalorder %s23, 0
      %p113 = por %p111, %p112
      %s114 = ssub.s32 %s17, %s24
      %p115 = scmp.eq.s32.totalorder %s114, 0
      %s117 = sadd.s32 %s116, 1
      %s118 = scalar_select %p115, %s116, %s117
      %p121 = pneg %p115
      %p122 = scmp.eq.s32.totalorder %s17, 1
      %p123 = por %p121, %p122
      %p124 = scmp.ne.s32.totalorder %s116, %s119
      %p125 = scmp.eq.s32.totalorder %s17, 0
      %p126 = por %p124, %p125
      %p127 = scmp.ne.s32.totalorder %s116, %s119
      %p128 = scmp.eq.s32.totalorder %s22, 1
      %p129 = por %p127, %p128
      %p130 = scmp.ne.s32.totalorder %s119, %s120
      %p131 = scmp.eq.s32.totalorder %s22, 0
      %p132 = por %p130, %p131
      %p133 = scmp.ne.s32.totalorder %s119, %s120
      %p134 = scmp.eq.s32.totalorder %s23, 1
      %p135 = por %p133, %p134
      %p137 = scmp.ne.s32.totalorder %s120, %s136
      %p138 = scmp.eq.s32.totalorder %s23, 0
      %p139 = por %p137, %p138
      %p140 = scmp.le.s32.totalorder 1, %s17
      %p141 = scmp.lt.s32.totalorder %s17, 3
      %p142 = pnand %p140, %p141
      %p143 = pneg %p142
      // Predicated region
      $region9: #{tpu_custom_call.1} parent=5 // pred_check
        _
      $region10: #{tpu_custom_call.1} parent=5 // pred_check_branch
        %145 = sbr.rel (%p142) target = $region12
      $region11: #{tpu_custom_call.1} parent=5 // pred_region
        %s146 = ssub.s32 %s17, 1
        // Predicated region
        $region13: #{tpu_custom_call.1} parent=11 // pred_check
          %p147 = pneg %p64
        $region14: #{tpu_custom_call.1} parent=11 // pred_check_branch
          %149 = sbr.rel (%p147) target = $region16
        $region15: #{tpu_custom_call.1} parent=11 // pred_region
          _
        $region16: #{tpu_custom_call.1} parent=11 // pred_fallthru
          _
        // Predicated region
        $region17: #{tpu_custom_call.1} parent=11 // pred_check
          %p150 = pneg %p85
        $region18: #{tpu_custom_call.1} parent=11 // pred_check_branch
          %152 = sbr.rel (%p150) target = $region20
        $region19: #{tpu_custom_call.1} parent=11 // pred_region
          _
        $region20: #{tpu_custom_call.1} parent=11 // pred_fallthru
          _
        // Predicated region
        $region21: #{tpu_custom_call.1} parent=11 // pred_check
          %p153 = pneg %p106
        $region22: #{tpu_custom_call.1} parent=11 // pred_check_branch
          %155 = sbr.rel (%p153) target = $region24
        $region23: #{tpu_custom_call.1} parent=11 // pred_region
          %s157 = ssub.s32 16384, 16384
          %158 = vsyncadd [#allocation6], %s157
          %s159 = sshll.u32 [#allocation5], 4
          %s160 = int_to_ptr.vmem [resolvable:$true] %s159
          %165 = dma.hbm_to_vmem [thread:$0]  %s3, 16384, %s160, [#allocation6], 256, 256, 16
        $region24: #{tpu_custom_call.1} parent=11 // pred_fallthru
          _
      $region12: #{tpu_custom_call.1} parent=5 // pred_fallthru
        _
      %p166 = scmp.lt.s32.totalorder %s17, 2
      // Predicated region
      $region25: #{tpu_custom_call.1} parent=5 // pred_check
        %p167 = pneg %p166
      $region26: #{tpu_custom_call.1} parent=5 // pred_check_branch
        %169 = sbr.rel (%p167) target = $region28
      $region27: #{tpu_custom_call.1} parent=5 // pred_region
        // Predicated region
        $region29: #{tpu_custom_call.1} parent=27 // pred_check
          %p170 = pneg %p37
        $region30: #{tpu_custom_call.1} parent=27 // pred_check_branch
          %172 = sbr.rel (%p170) target = $region32
        $region31: #{tpu_custom_call.1} parent=27 // pred_region
          %s173 = sand.u32 %s27, 1
          %s174 = scalar_lea.sflag [#allocation3], %s173
          %s175 = sand.u32 %s27, 1
          %s176 = smul.addr %s175, 64
          %s177 = scalar_lea.vmem [#allocation2], %s176
          %s179 = ssub.s32 1024, 1024
          %180 = vsyncadd %s174, %s179
          %s181 = smul.addr %s17, 8
          %s182 = smul.addr %s181, 128
          %s183 = scalar_lea.hbm %s0, %s182
          %s184 = sshll.u32 %s177, 4
          %s185 = int_to_ptr.vmem [resolvable:$true] %s184
          %190 = dma.hbm_to_vmem [thread:$0]  %s183, 1024, %s185, %s174, 256, 256, 16
        $region32: #{tpu_custom_call.1} parent=27 // pred_fallthru
          _
      $region28: #{tpu_custom_call.1} parent=5 // pred_fallthru
        _
      %p191 = scmp.le.s32.totalorder 1, %s17
      %p192 = scmp.lt.s32.totalorder %s17, 3
      %p193 = pnand %p191, %p192
      %p194 = pneg %p193
      // Predicated region
      $region33: #{tpu_custom_call.1} parent=5 // pred_check
        _
      $region34: #{tpu_custom_call.1} parent=5 // pred_check_branch
        %196 = sbr.rel (%p193) target = $region36
      $region35: #{tpu_custom_call.1} parent=5 // pred_region
        %s197 = ssub.s32 %s17, 1
        %s198 = sand.u32 %s30, 1
        %s199 = scalar_lea.sflag [#allocation3], %s198
        %s200 = sand.u32 %s30, 1
        %s201 = smul.addr %s200, 64
        %s202 = scalar_lea.vmem [#allocation2], %s201
        // Predicated region
        $region37: #{tpu_custom_call.1} parent=35 // pred_check
          %p203 = pneg %p43
        $region38: #{tpu_custom_call.1} parent=35 // pred_check_branch
          %205 = sbr.rel (%p203) target = $region40
        $region39: #{tpu_custom_call.1} parent=35 // pred_region
          %206 = dma.done %s199, 1024
        $region40: #{tpu_custom_call.1} parent=35 // pred_fallthru
          _
        // Predicated region
        $region41: #{tpu_custom_call.1} parent=35 // pred_check
          %p207 = pneg %p106
        $region42: #{tpu_custom_call.1} parent=35 // pred_check_branch
          %209 = sbr.rel (%p207) target = $region44
        $region43: #{tpu_custom_call.1} parent=35 // pred_region
          %210 = dma.done [#allocation6], 16384
        $region44: #{tpu_custom_call.1} parent=35 // pred_fallthru
          _
        %s211 = sand.u32 %s30, 1
        %s212 = scalar_lea.sflag [#allocation3], %s211
        %s213 = sand.u32 %s30, 1
        %s214 = smul.addr %s213, 64
        %s215 = scalar_lea.vmem [#allocation2], %s214
        %p216 = pneg %p43
        %p217 = pneg %p40
        %p218 = pneg %p64
        %p219 = pneg %p61
        %p220 = pneg %p85
        %p221 = pneg %p82
        %p222 = pneg %p106
        %p223 = pneg %p103
        %p224 = pneg %p132
        %p225 = pneg %p129
        %s226 = sand.u32 %s119, 1
        %s227 = scalar_lea.sflag [#allocation4], %s226
        %s228 = sand.u32 %s119, 1
        %s229 = smul.addr %s228, 64
        %s230 = scalar_lea.vmem [#allocation7], %s229
        %v231 = vld [vmem:[%s202] sm:$0xff]
        %v232 = vld [vmem:[%s202 + $0x8] sm:$0xff]
        %v233 = vld [vmem:[%s202 + $0x10] sm:$0xff]
        %v234 = vld [vmem:[%s202 + $0x18] sm:$0xff]
        %v235 = vld [vmem:[%s202 + $0x20] sm:$0xff]
        %v236 = vld [vmem:[%s202 + $0x28] sm:$0xff]
        %v237 = vld [vmem:[%s202 + $0x30] sm:$0xff]
        %v238 = vld [vmem:[%s202 + $0x38] sm:$0xff]
        %v239 = vadd.f32 %v231, %v232
        %240 = vadd.xlane.f32.xlu0 %v239
        %v241 = vpop.xlane.xlu0 %240
        %v242 = vadd.f32 %v233, %v234
        %243 = vadd.xlane.f32.xlu0 %v242
        %v244 = vpop.xlane.xlu0 %243
        %v245 = vadd.f32 %v235, %v236
        %246 = vadd.xlane.f32.xlu0 %v245
        %v247 = vpop.xlane.xlu0 %246
        %v248 = vadd.f32 %v237, %v238
        %249 = vadd.xlane.f32.xlu0 %v248
        %v250 = vpop.xlane.xlu0 %249
        %v251 = vmul.f32 %v241, 0.00390625
        %v252 = vmul.f32 %v244, 0.00390625
        %v253 = vmul.f32 %v247, 0.00390625
        %v254 = vmul.f32 %v250, 0.00390625
        %v255 = vmax.f32 %v231, %v232
        %256 = vmax.xlane.f32.xlu0 %v255
        %v257 = vpop.xlane.xlu0 %256
        %v258 = vmax.f32 %v233, %v234
        %259 = vmax.xlane.f32.xlu0 %v258
        %v260 = vpop.xlane.xlu0 %259
        %v261 = vmax.f32 %v235, %v236
        %262 = vmax.xlane.f32.xlu0 %v261
        %v263 = vpop.xlane.xlu0 %262
        %v264 = vmax.f32 %v237, %v238
        %265 = vmax.xlane.f32.xlu0 %v264
        %v266 = vpop.xlane.xlu0 %265
        %v271 = vlaneseq
        %v272 = vand.u32 %v271, 127
        %v273 = vlaneseq
        %v274 = vshrl.u32 %v273, 7
        %v275 = vsub.s32 %v272, %v274
        %v276 = vrot.slane %v251, %v275
        %v277 = vadd.s32 %v272, 4294967288
        %v278 = vlaneseq
        %v279 = vshrl.u32 %v278, 7
        %v280 = vsub.s32 %v277, %v279
        %v281 = vrot.slane %v252, %v280
        %vm282 = vcmask 130112
        %v283 = vsel %vm282, %v281, %v276
        %v284 = vadd.s32 %v272, 4294967280
        %v285 = vlaneseq
        %v286 = vshrl.u32 %v285, 7
        %v287 = vsub.s32 %v284, %v286
        %v288 = vrot.slane %v253, %v287
        %vm289 = vcmask 195712
        %v290 = vsel %vm289, %v288, %v283
        %v291 = vadd.s32 %v272, 4294967272
        %v292 = vlaneseq
        %v293 = vshrl.u32 %v292, 7
        %v294 = vsub.s32 %v291, %v293
        %v295 = vrot.slane %v254, %v294
        %vm296 = vcmask 261312
        %v297 = vsel %vm296, %v295, %v290
        %v303 = vlaneseq
        %v304 = vshrl.u32 %v303, 7
        %v305 = vsub.s32 %v272, %v304
        %v306 = vrot.slane %v257, %v305
        %v307 = vlaneseq
        %v308 = vshrl.u32 %v307, 7
        %v309 = vsub.s32 %v277, %v308
        %v310 = vrot.slane %v260, %v309
        %v311 = vsel %vm282, %v310, %v306
        %v312 = vlaneseq
        %v313 = vshrl.u32 %v312, 7
        %v314 = vsub.s32 %v284, %v313
        %v315 = vrot.slane %v263, %v314
        %v316 = vsel %vm289, %v315, %v311
        %v317 = vlaneseq
        %v318 = vshrl.u32 %v317, 7
        %v319 = vsub.s32 %v291, %v318
        %v320 = vrot.slane %v266, %v319
        %v321 = vsel %vm296, %v320, %v316
        %vm323 = vcmask 1040384
        %v324 = vsel %vm323, %v297, %v321
        %v325 = vld [vmem:[%s1] sm:$0xff]
        %v326 = vld [vmem:[%s1 + $0x8] sm:$0xff]
        %v327 = vld [vmem:[%s1 + $0x10] sm:$0xff]
        %v328 = vld [vmem:[%s1 + $0x18] sm:$0xff]
        %vm329 = vcmask 261120
        %v331 = vsel %vm329, %v324, 0
        %333 = vmatprep.subr.mxu0 0.0
        %334 = vmatpush1.msra.mxu0 0.0
        %335 = vmatprep.subr.mxu0 0.0
        %336 = vmatpush1.msra.mxu0 0.0
        %337 = vmatprep.subr.mxu0 0.0
        %338 = vmatpush1.msra.mxu0 0.0
        %339 = vmatprep.subr.mxu0 0.0
        %340 = vmatpush1.msra.mxu0 0.0
        %341 = vmatprep.subr.mxu0 0.0
        %342 = vmatpush1.msra.mxu0 0.0
        %343 = vmatprep.subr.mxu0 0.0
        %344 = vmatpush1.msra.mxu0 0.0
        %345 = vmatprep.subr.mxu0 0.0
        %346 = vmatpush1.msra.mxu0 0.0
        %347 = vmatprep.subr.mxu0 0.0
        %348 = vmatpush1.msra.mxu0 0.0
        %349 = vmatprep.subr.mxu0 0.0
        %350 = vmatpush1.msra.mxu0 0.0
        %351 = vmatprep.subr.mxu0 0.0
        %352 = vmatpush1.msra.mxu0 0.0
        %353 = vmatprep.subr.mxu0 0.0
        %354 = vmatpush1.msra.mxu0 0.0
        %355 = vmatprep.subr.mxu0 0.0
        %356 = vmatpush1.msra.mxu0 0.0
        %357 = vmatprep.subr.mxu0 0.0
        %v358 = vand.u32 %v328, 4294901760
        %359 = vmatpush1.msra.mxu0 %v358
        %360 = vmatprep.subr.mxu0 0.0
        %v361 = vand.u32 %v327, 4294901760
        %362 = vmatpush1.msra.mxu0 %v361
        %363 = vmatprep.subr.mxu0 0.0
        %v364 = vand.u32 %v326, 4294901760
        %365 = vmatpush1.msra.mxu0 %v364
        %366 = vmatprep.subr.mxu0 0.0
        %v367 = vand.u32 %v325, 4294901760
        %368 = vmatpush1.msra.mxu0 %v367
        %369 = vmatprep.subr.mxu0 0.0
        %370 = vmatpush2.msra.mxu0 0.0
        %371 = vmatprep.subr.mxu0 0.0
        %372 = vmatpush2.msra.mxu0 0.0
        %373 = vmatprep.subr.mxu0 0.0
        %374 = vmatpush2.msra.mxu0 0.0
        %375 = vmatprep.subr.mxu0 0.0
        %376 = vmatpush2.msra.mxu0 0.0
        %377 = vmatprep.subr.mxu0 0.0
        %378 = vmatpush2.msra.mxu0 0.0
        %379 = vmatprep.subr.mxu0 0.0
        %380 = vmatpush2.msra.mxu0 0.0
        %381 = vmatprep.subr.mxu0 0.0
        %382 = vmatpush2.msra.mxu0 0.0
        %383 = vmatprep.subr.mxu0 0.0
        %384 = vmatpush2.msra.mxu0 0.0
        %385 = vmatprep.subr.mxu0 0.0
        %386 = vmatpush2.msra.mxu0 0.0
        %387 = vmatprep.subr.mxu0 0.0
        %388 = vmatpush2.msra.mxu0 0.0
        %389 = vmatprep.subr.mxu0 0.0
        %390 = vmatpush2.msra.mxu0 0.0
        %391 = vmatprep.subr.mxu0 0.0
        %392 = vmatpush2.msra.mxu0 0.0
        %393 = vmatprep.subr.mxu0 0.0
        %394 = vmatpush2.msra.mxu0 0.0
        %395 = vmatprep.subr.mxu0 0.0
        %396 = vmatpush2.msra.mxu0 0.0
        %397 = vmatprep.subr.mxu0 0.0
        %398 = vmatpush2.msra.mxu0 0.0
        %399 = vmatprep.subr.mxu0 0.0
        %400 = vmatpush2.msra.mxu0 0.0
        %401 = vmatprep.mubr.f32.mxu0 0.0
        %v402 = vand.u32 %v331, 4294901760
        %v403 = vsub.f32 %v331, %v402
        %v404 = vand.u32 %v403, 4294901760
        %v405 = vsub.f32 %v403, %v404
        %v406 = vand.u32 %v405, 4294901760
        %407 = vmatmul.mubr.f32.gmra.mxu0 %v406
        %v408 = vpop.f32.mrf.mxu0
        %v409 = vadd.f32 0.0, %v408
        %v410 = vpop.f32.mrf.mxu0
        %411 = vdwg.mxu0
        %412 = vmatprep.subr.mxu0 0.0
        %413 = vmatpush1.msra.mxu0 0.0
        %414 = vmatprep.subr.mxu0 0.0
        %415 = vmatpush1.msra.mxu0 0.0
        %416 = vmatprep.subr.mxu0 0.0
        %417 = vmatpush1.msra.mxu0 0.0
        %418 = vmatprep.subr.mxu0 0.0
        %419 = vmatpush1.msra.mxu0 0.0
        %420 = vmatprep.subr.mxu0 0.0
        %421 = vmatpush1.msra.mxu0 0.0
        %422 = vmatprep.subr.mxu0 0.0
        %423 = vmatpush1.msra.mxu0 0.0
        %424 = vmatprep.subr.mxu0 0.0
        %425 = vmatpush1.msra.mxu0 0.0
        %426 = vmatprep.subr.mxu0 0.0
        %427 = vmatpush1.msra.mxu0 0.0
        %428 = vmatprep.subr.mxu0 0.0
        %429 = vmatpush1.msra.mxu0 0.0
        %430 = vmatprep.subr.mxu0 0.0
        %431 = vmatpush1.msra.mxu0 0.0
        %432 = vmatprep.subr.mxu0 0.0
        %433 = vmatpush1.msra.mxu0 0.0
        %434 = vmatprep.subr.mxu0 0.0
        %435 = vmatpush1.msra.mxu0 0.0
        %436 = vmatprep.subr.mxu0 0.0
        %v437 = vand.u32 %v328, 4294901760
        %v438 = vsub.f32 %v328, %v437
        %v439 = vand.u32 %v438, 4294901760
        %v440 = vsub.f32 %v438, %v439
        %v441 = vand.u32 %v440, 4294901760
        %442 = vmatpush1.msra.mxu0 %v441
        %443 = vmatprep.subr.mxu0 0.0
        %v444 = vand.u32 %v327, 4294901760
        %v445 = vsub.f32 %v327, %v444
        %v446 = vand.u32 %v445, 4294901760
        %v447 = vsub.f32 %v445, %v446
        %v448 = vand.u32 %v447, 4294901760
        %449 = vmatpush1.msra.mxu0 %v448
        %450 = vmatprep.subr.mxu0 0.0
        %v451 = vand.u32 %v326, 4294901760
        %v452 = vsub.f32 %v326, %v451
        %v453 = vand.u32 %v452, 4294901760
        %v454 = vsub.f32 %v452, %v453
        %v455 = vand.u32 %v454, 4294901760
        %456 = vmatpush1.msra.mxu0 %v455
        %457 = vmatprep.subr.mxu0 0.0
        %v458 = vand.u32 %v325, 4294901760
        %v459 = vsub.f32 %v325, %v458
        %v460 = vand.u32 %v459, 4294901760
        %v461 = vsub.f32 %v459, %v460
        %v462 = vand.u32 %v461, 4294901760
        %463 = vmatpush1.msra.mxu0 %v462
        %464 = vmatprep.subr.mxu0 0.0
        %465 = vmatpush2.msra.mxu0 0.0
        %466 = vmatprep.subr.mxu0 0.0
        %467 = vmatpush2.msra.mxu0 0.0
        %468 = vmatprep.subr.mxu0 0.0
        %469 = vmatpush2.msra.mxu0 0.0
        %470 = vmatprep.subr.mxu0 0.0
        %471 = vmatpush2.msra.mxu0 0.0
        %472 = vmatprep.subr.mxu0 0.0
        %473 = vmatpush2.msra.mxu0 0.0
        %474 = vmatprep.subr.mxu0 0.0
        %475 = vmatpush2.msra.mxu0 0.0
        %476 = vmatprep.subr.mxu0 0.0
        %477 = vmatpush2.msra.mxu0 0.0
        %478 = vmatprep.subr.mxu0 0.0
        %479 = vmatpush2.msra.mxu0 0.0
        %480 = vmatprep.subr.mxu0 0.0
        %481 = vmatpush2.msra.mxu0 0.0
        %482 = vmatprep.subr.mxu0 0.0
        %483 = vmatpush2.msra.mxu0 0.0
        %484 = vmatprep.subr.mxu0 0.0
        %485 = vmatpush2.msra.mxu0 0.0
        %486 = vmatprep.subr.mxu0 0.0
        %487 = vmatpush2.msra.mxu0 0.0
        %488 = vmatprep.subr.mxu0 0.0
        %489 = vmatpush2.msra.mxu0 0.0
        %490 = vmatprep.subr.mxu0 0.0
        %491 = vmatpush2.msra.mxu0 0.0
        %492 = vmatprep.subr.mxu0 0.0
        %493 = vmatpush2.msra.mxu0 0.0
        %494 = vmatprep.subr.mxu0 0.0
        %495 = vmatpush2.msra.mxu0 0.0
        %496 = vmatprep.mubr.f32.mxu0 0.0
        %v497 = vand.u32 %v331, 4294901760
        %498 = vmatmul.mubr.f32.gmra.mxu0 %v497
        %v499 = vpop.f32.mrf.mxu0
        %v500 = vadd.f32 %v409, %v499
        %v501 = vpop.f32.mrf.mxu0
        %502 = vdwg.mxu0
        %503 = vmatprep.subr.mxu0 0.0
        %504 = vmatpush1.msra.mxu0 0.0
        %505 = vmatprep.subr.mxu0 0.0
        %506 = vmatpush1.msra.mxu0 0.0
        %507 = vmatprep.subr.mxu0 0.0
        %508 = vmatpush1.msra.mxu0 0.0
        %509 = vmatprep.subr.mxu0 0.0
        %510 = vmatpush1.msra.mxu0 0.0
        %511 = vmatprep.subr.mxu0 0.0
        %512 = vmatpush1.msra.mxu0 0.0
        %513 = vmatprep.subr.mxu0 0.0
        %514 = vmatpush1.msra.mxu0 0.0
        %515 = vmatprep.subr.mxu0 0.0
        %516 = vmatpush1.msra.mxu0 0.0
        %517 = vmatprep.subr.mxu0 0.0
        %518 = vmatpush1.msra.mxu0 0.0
        %519 = vmatprep.subr.mxu0 0.0
        %520 = vmatpush1.msra.mxu0 0.0
        %521 = vmatprep.subr.mxu0 0.0
        %522 = vmatpush1.msra.mxu0 0.0
        %523 = vmatprep.subr.mxu0 0.0
        %524 = vmatpush1.msra.mxu0 0.0
        %525 = vmatprep.subr.mxu0 0.0
        %526 = vmatpush1.msra.mxu0 0.0
        %527 = vmatprep.subr.mxu0 0.0
        %v528 = vand.u32 %v328, 4294901760
        %v529 = vsub.f32 %v328, %v528
        %530 = vmatpush1.msra.mxu0 %v529
        %531 = vmatprep.subr.mxu0 0.0
        %v532 = vand.u32 %v327, 4294901760
        %v533 = vsub.f32 %v327, %v532
        %534 = vmatpush1.msra.mxu0 %v533
        %535 = vmatprep.subr.mxu0 0.0
        %v536 = vand.u32 %v326, 4294901760
        %v537 = vsub.f32 %v326, %v536
        %538 = vmatpush1.msra.mxu0 %v537
        %539 = vmatprep.subr.mxu0 0.0
        %v540 = vand.u32 %v325, 4294901760
        %v541 = vsub.f32 %v325, %v540
        %542 = vmatpush1.msra.mxu0 %v541
        %543 = vmatprep.subr.mxu0 0.0
        %544 = vmatpush2.msra.mxu0 0.0
        %545 = vmatprep.subr.mxu0 0.0
        %546 = vmatpush2.msra.mxu0 0.0
        %547 = vmatprep.subr.mxu0 0.0
        %548 = vmatpush2.msra.mxu0 0.0
        %549 = vmatprep.subr.mxu0 0.0
        %550 = vmatpush2.msra.mxu0 0.0
        %551 = vmatprep.subr.mxu0 0.0
        %552 = vmatpush2.msra.mxu0 0.0
        %553 = vmatprep.subr.mxu0 0.0
        %554 = vmatpush2.msra.mxu0 0.0
        %555 = vmatprep.subr.mxu0 0.0
        %556 = vmatpush2.msra.mxu0 0.0
        %557 = vmatprep.subr.mxu0 0.0
        %558 = vmatpush2.msra.mxu0 0.0
        %559 = vmatprep.subr.mxu0 0.0
        %560 = vmatpush2.msra.mxu0 0.0
        %561 = vmatprep.subr.mxu0 0.0
        %562 = vmatpush2.msra.mxu0 0.0
        %563 = vmatprep.subr.mxu0 0.0
        %564 = vmatpush2.msra.mxu0 0.0
        %565 = vmatprep.subr.mxu0 0.0
        %566 = vmatpush2.msra.mxu0 0.0
        %567 = vmatprep.subr.mxu0 0.0
        %568 = vmatpush2.msra.mxu0 0.0
        %569 = vmatprep.subr.mxu0 0.0
        %570 = vmatpush2.msra.mxu0 0.0
        %571 = vmatprep.subr.mxu0 0.0
        %572 = vmatpush2.msra.mxu0 0.0
        %573 = vmatprep.subr.mxu0 0.0
        %574 = vmatpush2.msra.mxu0 0.0
        %575 = vmatprep.mubr.f32.mxu0 0.0
        %v576 = vand.u32 %v331, 4294901760
        %v577 = vsub.f32 %v331, %v576
        %578 = vmatmul.mubr.f32.gmra.mxu0 %v577
        %v579 = vpop.f32.mrf.mxu0
        %v580 = vadd.f32 %v500, %v579
        %v581 = vpop.f32.mrf.mxu0
        %582 = vdwg.mxu0
        %583 = vmatprep.subr.mxu0 0.0
        %584 = vmatpush1.msra.mxu0 0.0
        %585 = vmatprep.subr.mxu0 0.0
        %586 = vmatpush1.msra.mxu0 0.0
        %587 = vmatprep.subr.mxu0 0.0
        %588 = vmatpush1.msra.mxu0 0.0
        %589 = vmatprep.subr.mxu0 0.0
        %590 = vmatpush1.msra.mxu0 0.0
        %591 = vmatprep.subr.mxu0 0.0
        %592 = vmatpush1.msra.mxu0 0.0
        %593 = vmatprep.subr.mxu0 0.0
        %594 = vmatpush1.msra.mxu0 0.0
        %595 = vmatprep.subr.mxu0 0.0
        %596 = vmatpush1.msra.mxu0 0.0
        %597 = vmatprep.subr.mxu0 0.0
        %598 = vmatpush1.msra.mxu0 0.0
        %599 = vmatprep.subr.mxu0 0.0
        %600 = vmatpush1.msra.mxu0 0.0
        %601 = vmatprep.subr.mxu0 0.0
        %602 = vmatpush1.msra.mxu0 0.0
        %603 = vmatprep.subr.mxu0 0.0
        %604 = vmatpush1.msra.mxu0 0.0
        %605 = vmatprep.subr.mxu0 0.0
        %606 = vmatpush1.msra.mxu0 0.0
        %607 = vmatprep.subr.mxu0 0.0
        %v608 = vand.u32 %v328, 4294901760
        %609 = vmatpush1.msra.mxu0 %v608
        %610 = vmatprep.subr.mxu0 0.0
        %v611 = vand.u32 %v327, 4294901760
        %612 = vmatpush1.msra.mxu0 %v611
        %613 = vmatprep.subr.mxu0 0.0
        %v614 = vand.u32 %v326, 4294901760
        %615 = vmatpush1.msra.mxu0 %v614
        %616 = vmatprep.subr.mxu0 0.0
        %v617 = vand.u32 %v325, 4294901760
        %618 = vmatpush1.msra.mxu0 %v617
        %619 = vmatprep.subr.mxu0 0.0
        %620 = vmatpush2.msra.mxu0 0.0
        %621 = vmatprep.subr.mxu0 0.0
        %622 = vmatpush2.msra.mxu0 0.0
        %623 = vmatprep.subr.mxu0 0.0
        %624 = vmatpush2.msra.mxu0 0.0
        %625 = vmatprep.subr.mxu0 0.0
        %626 = vmatpush2.msra.mxu0 0.0
        %627 = vmatprep.subr.mxu0 0.0
        %628 = vmatpush2.msra.mxu0 0.0
        %629 = vmatprep.subr.mxu0 0.0
        %630 = vmatpush2.msra.mxu0 0.0
        %631 = vmatprep.subr.mxu0 0.0
        %632 = vmatpush2.msra.mxu0 0.0
        %633 = vmatprep.subr.mxu0 0.0
        %634 = vmatpush2.msra.mxu0 0.0
        %635 = vmatprep.subr.mxu0 0.0
        %636 = vmatpush2.msra.mxu0 0.0
        %637 = vmatprep.subr.mxu0 0.0
        %638 = vmatpush2.msra.mxu0 0.0
        %639 = vmatprep.subr.mxu0 0.0
        %640 = vmatpush2.msra.mxu0 0.0
        %641 = vmatprep.subr.mxu0 0.0
        %642 = vmatpush2.msra.mxu0 0.0
        %643 = vmatprep.subr.mxu0 0.0
        %644 = vmatpush2.msra.mxu0 0.0
        %645 = vmatprep.subr.mxu0 0.0
        %646 = vmatpush2.msra.mxu0 0.0
        %647 = vmatprep.subr.mxu0 0.0
        %648 = vmatpush2.msra.mxu0 0.0
        %649 = vmatprep.subr.mxu0 0.0
        %650 = vmatpush2.msra.mxu0 0.0
        %651 = vmatprep.mubr.f32.mxu0 0.0
        %v652 = vand.u32 %v331, 4294901760
        %v653 = vsub.f32 %v331, %v652
        %v654 = vand.u32 %v653, 4294901760
        %655 = vmatmul.mubr.f32.gmra.mxu0 %v654
        %v656 = vpop.f32.mrf.mxu0
        %v657 = vadd.f32 %v580, %v656
        %v658 = vpop.f32.mrf.mxu0
        %659 = vdwg.mxu0
        %660 = vmatprep.subr.mxu0 0.0
        %661 = vmatpush1.msra.mxu0 0.0
        %662 = vmatprep.subr.mxu0 0.0
        %663 = vmatpush1.msra.mxu0 0.0
        %664 = vmatprep.subr.mxu0 0.0
        %665 = vmatpush1.msra.mxu0 0.0
        %666 = vmatprep.subr.mxu0 0.0
        %667 = vmatpush1.msra.mxu0 0.0
        %668 = vmatprep.subr.mxu0 0.0
        %669 = vmatpush1.msra.mxu0 0.0
        %670 = vmatprep.subr.mxu0 0.0
        %671 = vmatpush1.msra.mxu0 0.0
        %672 = vmatprep.subr.mxu0 0.0
        %673 = vmatpush1.msra.mxu0 0.0
        %674 = vmatprep.subr.mxu0 0.0
        %675 = vmatpush1.msra.mxu0 0.0
        %676 = vmatprep.subr.mxu0 0.0
        %677 = vmatpush1.msra.mxu0 0.0
        %678 = vmatprep.subr.mxu0 0.0
        %679 = vmatpush1.msra.mxu0 0.0
        %680 = vmatprep.subr.mxu0 0.0
        %681 = vmatpush1.msra.mxu0 0.0
        %682 = vmatprep.subr.mxu0 0.0
        %683 = vmatpush1.msra.mxu0 0.0
        %684 = vmatprep.subr.mxu0 0.0
        %v685 = vand.u32 %v328, 4294901760
        %v686 = vsub.f32 %v328, %v685
        %v687 = vand.u32 %v686, 4294901760
        %688 = vmatpush1.msra.mxu0 %v687
        %689 = vmatprep.subr.mxu0 0.0
        %v690 = vand.u32 %v327, 4294901760
        %v691 = vsub.f32 %v327, %v690
        %v692 = vand.u32 %v691, 4294901760
        %693 = vmatpush1.msra.mxu0 %v692
        %694 = vmatprep.subr.mxu0 0.0
        %v695 = vand.u32 %v326, 4294901760
        %v696 = vsub.f32 %v326, %v695
        %v697 = vand.u32 %v696, 4294901760
        %698 = vmatpush1.msra.mxu0 %v697
        %699 = vmatprep.subr.mxu0 0.0
        %v700 = vand.u32 %v325, 4294901760
        %v701 = vsub.f32 %v325, %v700
        %v702 = vand.u32 %v701, 4294901760
        %703 = vmatpush1.msra.mxu0 %v702
        %704 = vmatprep.subr.mxu0 0.0
        %705 = vmatpush2.msra.mxu0 0.0
        %706 = vmatprep.subr.mxu0 0.0
        %707 = vmatpush2.msra.mxu0 0.0
        %708 = vmatprep.subr.mxu0 0.0
        %709 = vmatpush2.msra.mxu0 0.0
        %710 = vmatprep.subr.mxu0 0.0
        %711 = vmatpush2.msra.mxu0 0.0
        %712 = vmatprep.subr.mxu0 0.0
        %713 = vmatpush2.msra.mxu0 0.0
        %714 = vmatprep.subr.mxu0 0.0
        %715 = vmatpush2.msra.mxu0 0.0
        %716 = vmatprep.subr.mxu0 0.0
        %717 = vmatpush2.msra.mxu0 0.0
        %718 = vmatprep.subr.mxu0 0.0
        %719 = vmatpush2.msra.mxu0 0.0
        %720 = vmatprep.subr.mxu0 0.0
        %721 = vmatpush2.msra.mxu0 0.0
        %722 = vmatprep.subr.mxu0 0.0
        %723 = vmatpush2.msra.mxu0 0.0
        %724 = vmatprep.subr.mxu0 0.0
        %725 = vmatpush2.msra.mxu0 0.0
        %726 = vmatprep.subr.mxu0 0.0
        %727 = vmatpush2.msra.mxu0 0.0
        %728 = vmatprep.subr.mxu0 0.0
        %729 = vmatpush2.msra.mxu0 0.0
        %730 = vmatprep.subr.mxu0 0.0
        %731 = vmatpush2.msra.mxu0 0.0
        %732 = vmatprep.subr.mxu0 0.0
        %733 = vmatpush2.msra.mxu0 0.0
        %734 = vmatprep.subr.mxu0 0.0
        %735 = vmatpush2.msra.mxu0 0.0
        %736 = vmatprep.mubr.f32.mxu0 0.0
        %v737 = vand.u32 %v331, 4294901760
        %738 = vmatmul.mubr.f32.gmra.mxu0 %v737
        %v739 = vpop.f32.mrf.mxu0
        %v740 = vadd.f32 %v657, %v739
        %v741 = vpop.f32.mrf.mxu0
        %742 = vdwg.mxu0
        %743 = vmatprep.subr.mxu0 0.0
        %744 = vmatpush1.msra.mxu0 0.0
        %745 = vmatprep.subr.mxu0 0.0
        %746 = vmatpush1.msra.mxu0 0.0
        %747 = vmatprep.subr.mxu0 0.0
        %748 = vmatpush1.msra.mxu0 0.0
        %749 = vmatprep.subr.mxu0 0.0
        %750 = vmatpush1.msra.mxu0 0.0
        %751 = vmatprep.subr.mxu0 0.0
        %752 = vmatpush1.msra.mxu0 0.0
        %753 = vmatprep.subr.mxu0 0.0
        %754 = vmatpush1.msra.mxu0 0.0
        %755 = vmatprep.subr.mxu0 0.0
        %756 = vmatpush1.msra.mxu0 0.0
        %757 = vmatprep.subr.mxu0 0.0
        %758 = vmatpush1.msra.mxu0 0.0
        %759 = vmatprep.subr.mxu0 0.0
        %760 = vmatpush1.msra.mxu0 0.0
        %761 = vmatprep.subr.mxu0 0.0
        %762 = vmatpush1.msra.mxu0 0.0
        %763 = vmatprep.subr.mxu0 0.0
        %764 = vmatpush1.msra.mxu0 0.0
        %765 = vmatprep.subr.mxu0 0.0
        %766 = vmatpush1.msra.mxu0 0.0
        %767 = vmatprep.subr.mxu0 0.0
        %v768 = vand.u32 %v328, 4294901760
        %769 = vmatpush1.msra.mxu0 %v768
        %770 = vmatprep.subr.mxu0 0.0
        %v771 = vand.u32 %v327, 4294901760
        %772 = vmatpush1.msra.mxu0 %v771
        %773 = vmatprep.subr.mxu0 0.0
        %v774 = vand.u32 %v326, 4294901760
        %775 = vmatpush1.msra.mxu0 %v774
        %776 = vmatprep.subr.mxu0 0.0
        %v777 = vand.u32 %v325, 4294901760
        %778 = vmatpush1.msra.mxu0 %v777
        %779 = vmatprep.subr.mxu0 0.0
        %780 = vmatpush2.msra.mxu0 0.0
        %781 = vmatprep.subr.mxu0 0.0
        %782 = vmatpush2.msra.mxu0 0.0
        %783 = vmatprep.subr.mxu0 0.0
        %784 = vmatpush2.msra.mxu0 0.0
        %785 = vmatprep.subr.mxu0 0.0
        %786 = vmatpush2.msra.mxu0 0.0
        %787 = vmatprep.subr.mxu0 0.0
        %788 = vmatpush2.msra.mxu0 0.0
        %789 = vmatprep.subr.mxu0 0.0
        %790 = vmatpush2.msra.mxu0 0.0
        %791 = vmatprep.subr.mxu0 0.0
        %792 = vmatpush2.msra.mxu0 0.0
        %793 = vmatprep.subr.mxu0 0.0
        %794 = vmatpush2.msra.mxu0 0.0
        %795 = vmatprep.subr.mxu0 0.0
        %796 = vmatpush2.msra.mxu0 0.0
        %797 = vmatprep.subr.mxu0 0.0
        %798 = vmatpush2.msra.mxu0 0.0
        %799 = vmatprep.subr.mxu0 0.0
        %800 = vmatpush2.msra.mxu0 0.0
        %801 = vmatprep.subr.mxu0 0.0
        %802 = vmatpush2.msra.mxu0 0.0
        %803 = vmatprep.subr.mxu0 0.0
        %804 = vmatpush2.msra.mxu0 0.0
        %805 = vmatprep.subr.mxu0 0.0
        %806 = vmatpush2.msra.mxu0 0.0
        %807 = vmatprep.subr.mxu0 0.0
        %808 = vmatpush2.msra.mxu0 0.0
        %809 = vmatprep.subr.mxu0 0.0
        %810 = vmatpush2.msra.mxu0 0.0
        %811 = vmatprep.mubr.f32.mxu0 0.0
        %v812 = vand.u32 %v331, 4294901760
        %813 = vmatmul.mubr.f32.gmra.mxu0 %v812
        %v814 = vpop.f32.mrf.mxu0
        %v815 = vadd.f32 %v740, %v814
        %v816 = vpop.f32.mrf.mxu0
        %817 = vdwg.mxu0
        %v818 = vmax.f32 %v815, 0.0
        %v819 = vld [vmem:[%s2] sm:$0xff]
        %vm820 = vcmask 64512
        %v822 = vsel %vm820, %v818, 0
        %824 = vmatprep.subr.mxu0 0.0
        %825 = vmatpush1.msra.mxu0 0.0
        %826 = vmatprep.subr.mxu0 0.0
        %827 = vmatpush1.msra.mxu0 0.0
        %828 = vmatprep.subr.mxu0 0.0
        %829 = vmatpush1.msra.mxu0 0.0
        %830 = vmatprep.subr.mxu0 0.0
        %831 = vmatpush1.msra.mxu0 0.0
        %832 = vmatprep.subr.mxu0 0.0
        %833 = vmatpush1.msra.mxu0 0.0
        %834 = vmatprep.subr.mxu0 0.0
        %835 = vmatpush1.msra.mxu0 0.0
        %836 = vmatprep.subr.mxu0 0.0
        %837 = vmatpush1.msra.mxu0 0.0
        %838 = vmatprep.subr.mxu0 0.0
        %839 = vmatpush1.msra.mxu0 0.0
        %840 = vmatprep.subr.mxu0 0.0
        %841 = vmatpush1.msra.mxu0 0.0
        %842 = vmatprep.subr.mxu0 0.0
        %843 = vmatpush1.msra.mxu0 0.0
        %844 = vmatprep.subr.mxu0 0.0
        %845 = vmatpush1.msra.mxu0 0.0
        %846 = vmatprep.subr.mxu0 0.0
        %847 = vmatpush1.msra.mxu0 0.0
        %848 = vmatprep.subr.mxu0 0.0
        %849 = vmatpush1.msra.mxu0 0.0
        %850 = vmatprep.subr.mxu0 0.0
        %851 = vmatpush1.msra.mxu0 0.0
        %852 = vmatprep.subr.mxu0 0.0
        %853 = vmatpush1.msra.mxu0 0.0
        %854 = vmatprep.subr.mxu0 0.0
        %v855 = vand.u32 %v819, 4294901760
        %856 = vmatpush1.msra.mxu0 %v855
        %857 = vmatprep.subr.mxu0 0.0
        %858 = vmatpush2.msra.mxu0 0.0
        %859 = vmatprep.subr.mxu0 0.0
        %860 = vmatpush2.msra.mxu0 0.0
        %861 = vmatprep.subr.mxu0 0.0
        %862 = vmatpush2.msra.mxu0 0.0
        %863 = vmatprep.subr.mxu0 0.0
        %864 = vmatpush2.msra.mxu0 0.0
        %865 = vmatprep.subr.mxu0 0.0
        %866 = vmatpush2.msra.mxu0 0.0
        %867 = vmatprep.subr.mxu0 0.0
        %868 = vmatpush2.msra.mxu0 0.0
        %869 = vmatprep.subr.mxu0 0.0
        %870 = vmatpush2.msra.mxu0 0.0
        %871 = vmatprep.subr.mxu0 0.0
        %872 = vmatpush2.msra.mxu0 0.0
        %873 = vmatprep.subr.mxu0 0.0
        %874 = vmatpush2.msra.mxu0 0.0
        %875 = vmatprep.subr.mxu0 0.0
        %876 = vmatpush2.msra.mxu0 0.0
        %877 = vmatprep.subr.mxu0 0.0
        %878 = vmatpush2.msra.mxu0 0.0
        %879 = vmatprep.subr.mxu0 0.0
        %880 = vmatpush2.msra.mxu0 0.0
        %881 = vmatprep.subr.mxu0 0.0
        %882 = vmatpush2.msra.mxu0 0.0
        %883 = vmatprep.subr.mxu0 0.0
        %884 = vmatpush2.msra.mxu0 0.0
        %885 = vmatprep.subr.mxu0 0.0
        %886 = vmatpush2.msra.mxu0 0.0
        %887 = vmatprep.subr.mxu0 0.0
        %888 = vmatpush2.msra.mxu0 0.0
        %889 = vmatprep.mubr.f32.mxu0 0.0
        %v890 = vand.u32 %v822, 4294901760
        %v891 = vsub.f32 %v822, %v890
        %v892 = vand.u32 %v891, 4294901760
        %v893 = vsub.f32 %v891, %v892
        %v894 = vand.u32 %v893, 4294901760
        %895 = vmatmul.mubr.f32.gmra.mxu0 %v894
        %v896 = vpop.f32.mrf.mxu0
        %v897 = vadd.f32 0.0, %v896
        %v898 = vpop.f32.mrf.mxu0
        %899 = vdwg.mxu0
        %900 = vmatprep.subr.mxu0 0.0
        %901 = vmatpush1.msra.mxu0 0.0
        %902 = vmatprep.subr.mxu0 0.0
        %903 = vmatpush1.msra.mxu0 0.0
        %904 = vmatprep.subr.mxu0 0.0
        %905 = vmatpush1.msra.mxu0 0.0
        %906 = vmatprep.subr.mxu0 0.0
        %907 = vmatpush1.msra.mxu0 0.0
        %908 = vmatprep.subr.mxu0 0.0
        %909 = vmatpush1.msra.mxu0 0.0
        %910 = vmatprep.subr.mxu0 0.0
        %911 = vmatpush1.msra.mxu0 0.0
        %912 = vmatprep.subr.mxu0 0.0
        %913 = vmatpush1.msra.mxu0 0.0
        %914 = vmatprep.subr.mxu0 0.0
        %915 = vmatpush1.msra.mxu0 0.0
        %916 = vmatprep.subr.mxu0 0.0
        %917 = vmatpush1.msra.mxu0 0.0
        %918 = vmatprep.subr.mxu0 0.0
        %919 = vmatpush1.msra.mxu0 0.0
        %920 = vmatprep.subr.mxu0 0.0
        %921 = vmatpush1.msra.mxu0 0.0
        %922 = vmatprep.subr.mxu0 0.0
        %923 = vmatpush1.msra.mxu0 0.0
        %924 = vmatprep.subr.mxu0 0.0
        %925 = vmatpush1.msra.mxu0 0.0
        %926 = vmatprep.subr.mxu0 0.0
        %927 = vmatpush1.msra.mxu0 0.0
        %928 = vmatprep.subr.mxu0 0.0
        %929 = vmatpush1.msra.mxu0 0.0
        %930 = vmatprep.subr.mxu0 0.0
        %v931 = vand.u32 %v819, 4294901760
        %v932 = vsub.f32 %v819, %v931
        %v933 = vand.u32 %v932, 4294901760
        %v934 = vsub.f32 %v932, %v933
        %v935 = vand.u32 %v934, 4294901760
        %936 = vmatpush1.msra.mxu0 %v935
        %937 = vmatprep.subr.mxu0 0.0
        %938 = vmatpush2.msra.mxu0 0.0
        %939 = vmatprep.subr.mxu0 0.0
        %940 = vmatpush2.msra.mxu0 0.0
        %941 = vmatprep.subr.mxu0 0.0
        %942 = vmatpush2.msra.mxu0 0.0
        %943 = vmatprep.subr.mxu0 0.0
        %944 = vmatpush2.msra.mxu0 0.0
        %945 = vmatprep.subr.mxu0 0.0
        %946 = vmatpush2.msra.mxu0 0.0
        %947 = vmatprep.subr.mxu0 0.0
        %948 = vmatpush2.msra.mxu0 0.0
        %949 = vmatprep.subr.mxu0 0.0
        %950 = vmatpush2.msra.mxu0 0.0
        %951 = vmatprep.subr.mxu0 0.0
        %952 = vmatpush2.msra.mxu0 0.0
        %953 = vmatprep.subr.mxu0 0.0
        %954 = vmatpush2.msra.mxu0 0.0
        %955 = vmatprep.subr.mxu0 0.0
        %956 = vmatpush2.msra.mxu0 0.0
        %957 = vmatprep.subr.mxu0 0.0
        %958 = vmatpush2.msra.mxu0 0.0
        %959 = vmatprep.subr.mxu0 0.0
        %960 = vmatpush2.msra.mxu0 0.0
        %961 = vmatprep.subr.mxu0 0.0
        %962 = vmatpush2.msra.mxu0 0.0
        %963 = vmatprep.subr.mxu0 0.0
        %964 = vmatpush2.msra.mxu0 0.0
        %965 = vmatprep.subr.mxu0 0.0
        %966 = vmatpush2.msra.mxu0 0.0
        %967 = vmatprep.subr.mxu0 0.0
        %968 = vmatpush2.msra.mxu0 0.0
        %969 = vmatprep.mubr.f32.mxu0 0.0
        %v970 = vand.u32 %v822, 4294901760
        %971 = vmatmul.mubr.f32.gmra.mxu0 %v970
        %v972 = vpop.f32.mrf.mxu0
        %v973 = vadd.f32 %v897, %v972
        %v974 = vpop.f32.mrf.mxu0
        %975 = vdwg.mxu0
        %976 = vmatprep.subr.mxu0 0.0
        %977 = vmatpush1.msra.mxu0 0.0
        %978 = vmatprep.subr.mxu0 0.0
        %979 = vmatpush1.msra.mxu0 0.0
        %980 = vmatprep.subr.mxu0 0.0
        %981 = vmatpush1.msra.mxu0 0.0
        %982 = vmatprep.subr.mxu0 0.0
        %983 = vmatpush1.msra.mxu0 0.0
        %984 = vmatprep.subr.mxu0 0.0
        %985 = vmatpush1.msra.mxu0 0.0
        %986 = vmatprep.subr.mxu0 0.0
        %987 = vmatpush1.msra.mxu0 0.0
        %988 = vmatprep.subr.mxu0 0.0
        %989 = vmatpush1.msra.mxu0 0.0
        %990 = vmatprep.subr.mxu0 0.0
        %991 = vmatpush1.msra.mxu0 0.0
        %992 = vmatprep.subr.mxu0 0.0
        %993 = vmatpush1.msra.mxu0 0.0
        %994 = vmatprep.subr.mxu0 0.0
        %995 = vmatpush1.msra.mxu0 0.0
        %996 = vmatprep.subr.mxu0 0.0
        %997 = vmatpush1.msra.mxu0 0.0
        %998 = vmatprep.subr.mxu0 0.0
        %999 = vmatpush1.msra.mxu0 0.0
        %1000 = vmatprep.subr.mxu0 0.0
        %1001 = vmatpush1.msra.mxu0 0.0
        %1002 = vmatprep.subr.mxu0 0.0
        %1003 = vmatpush1.msra.mxu0 0.0
        %1004 = vmatprep.subr.mxu0 0.0
        %1005 = vmatpush1.msra.mxu0 0.0
        %1006 = vmatprep.subr.mxu0 0.0
        %v1007 = vand.u32 %v819, 4294901760
        %v1008 = vsub.f32 %v819, %v1007
        %1009 = vmatpush1.msra.mxu0 %v1008
        %1010 = vmatprep.subr.mxu0 0.0
        %1011 = vmatpush2.msra.mxu0 0.0
        %1012 = vmatprep.subr.mxu0 0.0
        %1013 = vmatpush2.msra.mxu0 0.0
        %1014 = vmatprep.subr.mxu0 0.0
        %1015 = vmatpush2.msra.mxu0 0.0
        %1016 = vmatprep.subr.mxu0 0.0
        %1017 = vmatpush2.msra.mxu0 0.0
        %1018 = vmatprep.subr.mxu0 0.0
        %1019 = vmatpush2.msra.mxu0 0.0
        %1020 = vmatprep.subr.mxu0 0.0
        %1021 = vmatpush2.msra.mxu0 0.0
        %1022 = vmatprep.subr.mxu0 0.0
        %1023 = vmatpush2.msra.mxu0 0.0
        %1024 = vmatprep.subr.mxu0 0.0
        %1025 = vmatpush2.msra.mxu0 0.0
        %1026 = vmatprep.subr.mxu0 0.0
        %1027 = vmatpush2.msra.mxu0 0.0
        %1028 = vmatprep.subr.mxu0 0.0
        %1029 = vmatpush2.msra.mxu0 0.0
        %1030 = vmatprep.subr.mxu0 0.0
        %1031 = vmatpush2.msra.mxu0 0.0
        %1032 = vmatprep.subr.mxu0 0.0
        %1033 = vmatpush2.msra.mxu0 0.0
        %1034 = vmatprep.subr.mxu0 0.0
        %1035 = vmatpush2.msra.mxu0 0.0
        %1036 = vmatprep.subr.mxu0 0.0
        %1037 = vmatpush2.msra.mxu0 0.0
        %1038 = vmatprep.subr.mxu0 0.0
        %1039 = vmatpush2.msra.mxu0 0.0
        %1040 = vmatprep.subr.mxu0 0.0
        %1041 = vmatpush2.msra.mxu0 0.0
        %1042 = vmatprep.mubr.f32.mxu0 0.0
        %v1043 = vand.u32 %v822, 4294901760
        %v1044 = vsub.f32 %v822, %v1043
        %1045 = vmatmul.mubr.f32.gmra.mxu0 %v1044
        %v1046 = vpop.f32.mrf.mxu0
        %v1047 = vadd.f32 %v973, %v1046
        %v1048 = vpop.f32.mrf.mxu0
        %1049 = vdwg.mxu0
        %1050 = vmatprep.subr.mxu0 0.0
        %1051 = vmatpush1.msra.mxu0 0.0
        %1052 = vmatprep.subr.mxu0 0.0
        %1053 = vmatpush1.msra.mxu0 0.0
        %1054 = vmatprep.subr.mxu0 0.0
        %1055 = vmatpush1.msra.mxu0 0.0
        %1056 = vmatprep.subr.mxu0 0.0
        %1057 = vmatpush1.msra.mxu0 0.0
        %1058 = vmatprep.subr.mxu0 0.0
        %1059 = vmatpush1.msra.mxu0 0.0
        %1060 = vmatprep.subr.mxu0 0.0
        %1061 = vmatpush1.msra.mxu0 0.0
        %1062 = vmatprep.subr.mxu0 0.0
        %1063 = vmatpush1.msra.mxu0 0.0
        %1064 = vmatprep.subr.mxu0 0.0
        %1065 = vmatpush1.msra.mxu0 0.0
        %1066 = vmatprep.subr.mxu0 0.0
        %1067 = vmatpush1.msra.mxu0 0.0
        %1068 = vmatprep.subr.mxu0 0.0
        %1069 = vmatpush1.msra.mxu0 0.0
        %1070 = vmatprep.subr.mxu0 0.0
        %1071 = vmatpush1.msra.mxu0 0.0
        %1072 = vmatprep.subr.mxu0 0.0
        %1073 = vmatpush1.msra.mxu0 0.0
        %1074 = vmatprep.subr.mxu0 0.0
        %1075 = vmatpush1.msra.mxu0 0.0
        %1076 = vmatprep.subr.mxu0 0.0
        %1077 = vmatpush1.msra.mxu0 0.0
        %1078 = vmatprep.subr.mxu0 0.0
        %1079 = vmatpush1.msra.mxu0 0.0
        %1080 = vmatprep.subr.mxu0 0.0
        %v1081 = vand.u32 %v819, 4294901760
        %1082 = vmatpush1.msra.mxu0 %v1081
        %1083 = vmatprep.subr.mxu0 0.0
        %1084 = vmatpush2.msra.mxu0 0.0
        %1085 = vmatprep.subr.mxu0 0.0
        %1086 = vmatpush2.msra.mxu0 0.0
        %1087 = vmatprep.subr.mxu0 0.0
        %1088 = vmatpush2.msra.mxu0 0.0
        %1089 = vmatprep.subr.mxu0 0.0
        %1090 = vmatpush2.msra.mxu0 0.0
        %1091 = vmatprep.subr.mxu0 0.0
        %1092 = vmatpush2.msra.mxu0 0.0
        %1093 = vmatprep.subr.mxu0 0.0
        %1094 = vmatpush2.msra.mxu0 0.0
        %1095 = vmatprep.subr.mxu0 0.0
        %1096 = vmatpush2.msra.mxu0 0.0
        %1097 = vmatprep.subr.mxu0 0.0
        %1098 = vmatpush2.msra.mxu0 0.0
        %1099 = vmatprep.subr.mxu0 0.0
        %1100 = vmatpush2.msra.mxu0 0.0
        %1101 = vmatprep.subr.mxu0 0.0
        %1102 = vmatpush2.msra.mxu0 0.0
        %1103 = vmatprep.subr.mxu0 0.0
        %1104 = vmatpush2.msra.mxu0 0.0
        %1105 = vmatprep.subr.mxu0 0.0
        %1106 = vmatpush2.msra.mxu0 0.0
        %1107 = vmatprep.subr.mxu0 0.0
        %1108 = vmatpush2.msra.mxu0 0.0
        %1109 = vmatprep.subr.mxu0 0.0
        %1110 = vmatpush2.msra.mxu0 0.0
        %1111 = vmatprep.subr.mxu0 0.0
        %1112 = vmatpush2.msra.mxu0 0.0
        %1113 = vmatprep.subr.mxu0 0.0
        %1114 = vmatpush2.msra.mxu0 0.0
        %1115 = vmatprep.mubr.f32.mxu0 0.0
        %v1116 = vand.u32 %v822, 4294901760
        %v1117 = vsub.f32 %v822, %v1116
        %v1118 = vand.u32 %v1117, 4294901760
        %1119 = vmatmul.mubr.f32.gmra.mxu0 %v1118
        %v1120 = vpop.f32.mrf.mxu0
        %v1121 = vadd.f32 %v1047, %v1120
        %v1122 = vpop.f32.mrf.mxu0
        %1123 = vdwg.mxu0
        %1124 = vmatprep.subr.mxu0 0.0
        %1125 = vmatpush1.msra.mxu0 0.0
        %1126 = vmatprep.subr.mxu0 0.0
        %1127 = vmatpush1.msra.mxu0 0.0
        %1128 = vmatprep.subr.mxu0 0.0
        %1129 = vmatpush1.msra.mxu0 0.0
        %1130 = vmatprep.subr.mxu0 0.0
        %1131 = vmatpush1.msra.mxu0 0.0
        %1132 = vmatprep.subr.mxu0 0.0
        %1133 = vmatpush1.msra.mxu0 0.0
        %1134 = vmatprep.subr.mxu0 0.0
        %1135 = vmatpush1.msra.mxu0 0.0
        %1136 = vmatprep.subr.mxu0 0.0
        %1137 = vmatpush1.msra.mxu0 0.0
        %1138 = vmatprep.subr.mxu0 0.0
        %1139 = vmatpush1.msra.mxu0 0.0
        %1140 = vmatprep.subr.mxu0 0.0
        %1141 = vmatpush1.msra.mxu0 0.0
        %1142 = vmatprep.subr.mxu0 0.0
        %1143 = vmatpush1.msra.mxu0 0.0
        %1144 = vmatprep.subr.mxu0 0.0
        %1145 = vmatpush1.msra.mxu0 0.0
        %1146 = vmatprep.subr.mxu0 0.0
        %1147 = vmatpush1.msra.mxu0 0.0
        %1148 = vmatprep.subr.mxu0 0.0
        %1149 = vmatpush1.msra.mxu0 0.0
        %1150 = vmatprep.subr.mxu0 0.0
        %1151 = vmatpush1.msra.mxu0 0.0
        %1152 = vmatprep.subr.mxu0 0.0
        %1153 = vmatpush1.msra.mxu0 0.0
        %1154 = vmatprep.subr.mxu0 0.0
        %v1155 = vand.u32 %v819, 4294901760
        %v1156 = vsub.f32 %v819, %v1155
        %v1157 = vand.u32 %v1156, 4294901760
        %1158 = vmatpush1.msra.mxu0 %v1157
        %1159 = vmatprep.subr.mxu0 0.0
        %1160 = vmatpush2.msra.mxu0 0.0
        %1161 = vmatprep.subr.mxu0 0.0
        %1162 = vmatpush2.msra.mxu0 0.0
        %1163 = vmatprep.subr.mxu0 0.0
        %1164 = vmatpush2.msra.mxu0 0.0
        %1165 = vmatprep.subr.mxu0 0.0
        %1166 = vmatpush2.msra.mxu0 0.0
        %1167 = vmatprep.subr.mxu0 0.0
        %1168 = vmatpush2.msra.mxu0 0.0
        %1169 = vmatprep.subr.mxu0 0.0
        %1170 = vmatpush2.msra.mxu0 0.0
        %1171 = vmatprep.subr.mxu0 0.0
        %1172 = vmatpush2.msra.mxu0 0.0
        %1173 = vmatprep.subr.mxu0 0.0
        %1174 = vmatpush2.msra.mxu0 0.0
        %1175 = vmatprep.subr.mxu0 0.0
        %1176 = vmatpush2.msra.mxu0 0.0
        %1177 = vmatprep.subr.mxu0 0.0
        %1178 = vmatpush2.msra.mxu0 0.0
        %1179 = vmatprep.subr.mxu0 0.0
        %1180 = vmatpush2.msra.mxu0 0.0
        %1181 = vmatprep.subr.mxu0 0.0
        %1182 = vmatpush2.msra.mxu0 0.0
        %1183 = vmatprep.subr.mxu0 0.0
        %1184 = vmatpush2.msra.mxu0 0.0
        %1185 = vmatprep.subr.mxu0 0.0
        %1186 = vmatpush2.msra.mxu0 0.0
        %1187 = vmatprep.subr.mxu0 0.0
        %1188 = vmatpush2.msra.mxu0 0.0
        %1189 = vmatprep.subr.mxu0 0.0
        %1190 = vmatpush2.msra.mxu0 0.0
        %1191 = vmatprep.mubr.f32.mxu0 0.0
        %v1192 = vand.u32 %v822, 4294901760
        %1193 = vmatmul.mubr.f32.gmra.mxu0 %v1192
        %v1194 = vpop.f32.mrf.mxu0
        %v1195 = vadd.f32 %v1121, %v1194
        %v1196 = vpop.f32.mrf.mxu0
        %1197 = vdwg.mxu0
        %1198 = vmatprep.subr.mxu0 0.0
        %1199 = vmatpush1.msra.mxu0 0.0
        %1200 = vmatprep.subr.mxu0 0.0
        %1201 = vmatpush1.msra.mxu0 0.0
        %1202 = vmatprep.subr.mxu0 0.0
        %1203 = vmatpush1.msra.mxu0 0.0
        %1204 = vmatprep.subr.mxu0 0.0
        %1205 = vmatpush1.msra.mxu0 0.0
        %1206 = vmatprep.subr.mxu0 0.0
        %1207 = vmatpush1.msra.mxu0 0.0
        %1208 = vmatprep.subr.mxu0 0.0
        %1209 = vmatpush1.msra.mxu0 0.0
        %1210 = vmatprep.subr.mxu0 0.0
        %1211 = vmatpush1.msra.mxu0 0.0
        %1212 = vmatprep.subr.mxu0 0.0
        %1213 = vmatpush1.msra.mxu0 0.0
        %1214 = vmatprep.subr.mxu0 0.0
        %1215 = vmatpush1.msra.mxu0 0.0
        %1216 = vmatprep.subr.mxu0 0.0
        %1217 = vmatpush1.msra.mxu0 0.0
        %1218 = vmatprep.subr.mxu0 0.0
        %1219 = vmatpush1.msra.mxu0 0.0
        %1220 = vmatprep.subr.mxu0 0.0
        %1221 = vmatpush1.msra.mxu0 0.0
        %1222 = vmatprep.subr.mxu0 0.0
        %1223 = vmatpush1.msra.mxu0 0.0
        %1224 = vmatprep.subr.mxu0 0.0
        %1225 = vmatpush1.msra.mxu0 0.0
        %1226 = vmatprep.subr.mxu0 0.0
        %1227 = vmatpush1.msra.mxu0 0.0
        %1228 = vmatprep.subr.mxu0 0.0
        %v1229 = vand.u32 %v819, 4294901760
        %1230 = vmatpush1.msra.mxu0 %v1229
        %1231 = vmatprep.subr.mxu0 0.0
        %1232 = vmatpush2.msra.mxu0 0.0
        %1233 = vmatprep.subr.mxu0 0.0
        %1234 = vmatpush2.msra.mxu0 0.0
        %1235 = vmatprep.subr.mxu0 0.0
        %1236 = vmatpush2.msra.mxu0 0.0
        %1237 = vmatprep.subr.mxu0 0.0
        %1238 = vmatpush2.msra.mxu0 0.0
        %1239 = vmatprep.subr.mxu0 0.0
        %1240 = vmatpush2.msra.mxu0 0.0
        %1241 = vmatprep.subr.mxu0 0.0
        %1242 = vmatpush2.msra.mxu0 0.0
        %1243 = vmatprep.subr.mxu0 0.0
        %1244 = vmatpush2.msra.mxu0 0.0
        %1245 = vmatprep.subr.mxu0 0.0
        %1246 = vmatpush2.msra.mxu0 0.0
        %1247 = vmatprep.subr.mxu0 0.0
        %1248 = vmatpush2.msra.mxu0 0.0
        %1249 = vmatprep.subr.mxu0 0.0
        %1250 = vmatpush2.msra.mxu0 0.0
        %1251 = vmatprep.subr.mxu0 0.0
        %1252 = vmatpush2.msra.mxu0 0.0
        %1253 = vmatprep.subr.mxu0 0.0
        %1254 = vmatpush2.msra.mxu0 0.0
        %1255 = vmatprep.subr.mxu0 0.0
        %1256 = vmatpush2.msra.mxu0 0.0
        %1257 = vmatprep.subr.mxu0 0.0
        %1258 = vmatpush2.msra.mxu0 0.0
        %1259 = vmatprep.subr.mxu0 0.0
        %1260 = vmatpush2.msra.mxu0 0.0
        %1261 = vmatprep.subr.mxu0 0.0
        %1262 = vmatpush2.msra.mxu0 0.0
        %1263 = vmatprep.mubr.f32.mxu0 0.0
        %v1264 = vand.u32 %v822, 4294901760
        %1265 = vmatmul.mubr.f32.gmra.mxu0 %v1264
        %v1266 = vpop.f32.mrf.mxu0
        %v1267 = vadd.f32 %v1195, %v1266
        %v1268 = vpop.f32.mrf.mxu0
        %1269 = vdwg.mxu0
        %v1271 = vrot.slane %v1267, 1
        %v1273 = vadd.f32 %v1267, %v1271
        %v1274 = vsub.f32 0.0, %v1273
        %v1275 = vmul.f32 %v1274, 1.442695
        %v1276 = vpow.pop %v1275
        %v1277 = vadd.f32 %v1276, 1.0
        %v1278 = vrcp.pop %v1277
        %v1279 = vmul.f32 1.0, %v1278
        %v1280 = vlaneseq
        %v1281 = vshrl.u32 %v1280, 7
        %v1282 = vsub.s32 0, %v1281
        %v1283 = vrot.slane %v1279, %v1282
        %1285 = vbcast.lane.b32.xlu0 %v1283, 256
        %v1286 = vpop.permute.xlu0 %1285
        %s1288 = sor.u32 256, 8
        %1289 = vbcast.lane.b32.xlu0 %v1283, %s1288
        %v1290 = vpop.permute.xlu0 %1289
        %s1292 = sor.u32 256, 16
        %1293 = vbcast.lane.b32.xlu0 %v1283, %s1292
        %v1294 = vpop.permute.xlu0 %1293
        %s1296 = sor.u32 256, 24
        %1297 = vbcast.lane.b32.xlu0 %v1283, %s1296
        %v1298 = vpop.permute.xlu0 %1297
        %v1299 = vmul.f32 %v231, %v1286
        %v1300 = vmul.f32 %v232, %v1286
        %v1301 = vmul.f32 %v233, %v1290
        %v1302 = vmul.f32 %v234, %v1290
        %v1303 = vmul.f32 %v235, %v1294
        %v1304 = vmul.f32 %v236, %v1294
        %v1305 = vmul.f32 %v237, %v1298
        %v1306 = vmul.f32 %v238, %v1298
        %v1307 = vadd.f32 %v1299, %v1301
        %v1308 = vadd.f32 %v1307, %v1303
        %v1309 = vadd.f32 %v1308, %v1305
        %v1310 = vrot.slane %v1309, 4
        %v1311 = vadd.f32 %v1309, %v1310
        %v1312 = vrot.slane %v1311, 2
        %v1313 = vadd.f32 %v1311, %v1312
        %v1314 = vrot.slane %v1313, 1
        %v1315 = vadd.f32 %v1313, %v1314
        %v1316 = vadd.f32 %v1300, %v1302
        %v1317 = vadd.f32 %v1316, %v1304
        %v1318 = vadd.f32 %v1317, %v1306
        %v1319 = vrot.slane %v1318, 4
        %v1320 = vadd.f32 %v1318, %v1319
        %v1321 = vrot.slane %v1320, 2
        %v1322 = vadd.f32 %v1320, %v1321
        %v1323 = vrot.slane %v1322, 1
        %v1324 = vadd.f32 %v1322, %v1323
        %v1325 = vrcp.pop 32.0
        %v1326 = vmul.f32 %v1315, %v1325
        %v1327 = vmul.f32 %v1324, %v1325
        %v1328 = vmax.f32 %v1299, %v1303
        %v1329 = vmax.f32 %v1301, %v1305
        %v1330 = vmax.f32 %v1328, %v1329
        %v1331 = vrot.slane %v1330, 4
        %v1332 = vmax.f32 %v1330, %v1331
        %v1333 = vrot.slane %v1332, 2
        %v1334 = vmax.f32 %v1332, %v1333
        %v1335 = vrot.slane %v1334, 1
        %v1336 = vmax.f32 %v1334, %v1335
        %v1337 = vmax.f32 %v1300, %v1304
        %v1338 = vmax.f32 %v1302, %v1306
        %v1339 = vmax.f32 %v1337, %v1338
        %v1340 = vrot.slane %v1339, 4
        %v1341 = vmax.f32 %v1339, %v1340
        %v1342 = vrot.slane %v1341, 2
        %v1343 = vmax.f32 %v1341, %v1342
        %v1344 = vrot.slane %v1343, 1
        %v1345 = vmax.f32 %v1343, %v1344
        %v1346 = vld [vmem:[#allocation5] sm:$0xff]
        %v1347 = vld [vmem:[#allocation5 + $0x8] sm:$0xff]
        %v1348 = vld [vmem:[#allocation5 + $0x10] sm:$0xff]
        %v1349 = vld [vmem:[#allocation5 + $0x18] sm:$0xff]
        %v1350 = vld [vmem:[#allocation5 + $0x20] sm:$0xff]
        %v1351 = vld [vmem:[#allocation5 + $0x28] sm:$0xff]
        %v1352 = vld [vmem:[#allocation5 + $0x30] sm:$0xff]
        %v1353 = vld [vmem:[#allocation5 + $0x38] sm:$0xff]
        %v1354 = vld [vmem:[#allocation5 + $0x40] sm:$0xff]
        %v1355 = vld [vmem:[#allocation5 + $0x48] sm:$0xff]
        %v1356 = vld [vmem:[#allocation5 + $0x50] sm:$0xff]
        %v1357 = vld [vmem:[#allocation5 + $0x58] sm:$0xff]
        %v1358 = vld [vmem:[#allocation5 + $0x60] sm:$0xff]
        %v1359 = vld [vmem:[#allocation5 + $0x68] sm:$0xff]
        %v1360 = vld [vmem:[#allocation5 + $0x70] sm:$0xff]
        %v1361 = vld [vmem:[#allocation5 + $0x78] sm:$0xff]
        %v1362 = vld [vmem:[#allocation5 + $0x80] sm:$0xff]
        %v1363 = vld [vmem:[#allocation5 + $0x88] sm:$0xff]
        %v1364 = vld [vmem:[#allocation5 + $0x90] sm:$0xff]
        %v1365 = vld [vmem:[#allocation5 + $0x98] sm:$0xff]
        %v1366 = vld [vmem:[#allocation5 + $0xa0] sm:$0xff]
        %v1367 = vld [vmem:[#allocation5 + $0xa8] sm:$0xff]
        %v1368 = vld [vmem:[#allocation5 + $0xb0] sm:$0xff]
        %v1369 = vld [vmem:[#allocation5 + $0xb8] sm:$0xff]
        %v1370 = vld [vmem:[#allocation5 + $0xc0] sm:$0xff]
        %v1371 = vld [vmem:[#allocation5 + $0xc8] sm:$0xff]
        %v1372 = vld [vmem:[#allocation5 + $0xd0] sm:$0xff]
        %v1373 = vld [vmem:[#allocation5 + $0xd8] sm:$0xff]
        %v1374 = vld [vmem:[#allocation5 + $0xe0] sm:$0xff]
        %v1375 = vld [vmem:[#allocation5 + $0xe8] sm:$0xff]
        %v1376 = vld [vmem:[#allocation5 + $0xf0] sm:$0xff]
        %v1377 = vld [vmem:[#allocation5 + $0xf8] sm:$0xff]
        %v1378 = vld [vmem:[#allocation5 + $0x100] sm:$0xff]
        %v1379 = vld [vmem:[#allocation5 + $0x108] sm:$0xff]
        %v1380 = vld [vmem:[#allocation5 + $0x110] sm:$0xff]
        %v1381 = vld [vmem:[#allocation5 + $0x118] sm:$0xff]
        %v1382 = vld [vmem:[#allocation5 + $0x120] sm:$0xff]
        %v1383 = vld [vmem:[#allocation5 + $0x128] sm:$0xff]
        %v1384 = vld [vmem:[#allocation5 + $0x130] sm:$0xff]
        %v1385 = vld [vmem:[#allocation5 + $0x138] sm:$0xff]
        %v1386 = vld [vmem:[#allocation5 + $0x140] sm:$0xff]
        %v1387 = vld [vmem:[#allocation5 + $0x148] sm:$0xff]
        %v1388 = vld [vmem:[#allocation5 + $0x150] sm:$0xff]
        %v1389 = vld [vmem:[#allocation5 + $0x158] sm:$0xff]
        %v1390 = vld [vmem:[#allocation5 + $0x160] sm:$0xff]
        %v1391 = vld [vmem:[#allocation5 + $0x168] sm:$0xff]
        %v1392 = vld [vmem:[#allocation5 + $0x170] sm:$0xff]
        %v1393 = vld [vmem:[#allocation5 + $0x178] sm:$0xff]
        %v1394 = vld [vmem:[#allocation5 + $0x180] sm:$0xff]
        %v1395 = vld [vmem:[#allocation5 + $0x188] sm:$0xff]
        %v1396 = vld [vmem:[#allocation5 + $0x190] sm:$0xff]
        %v1397 = vld [vmem:[#allocation5 + $0x198] sm:$0xff]
        %v1398 = vld [vmem:[#allocation5 + $0x1a0] sm:$0xff]
        %v1399 = vld [vmem:[#allocation5 + $0x1a8] sm:$0xff]
        %v1400 = vld [vmem:[#allocation5 + $0x1b0] sm:$0xff]
        %v1401 = vld [vmem:[#allocation5 + $0x1b8] sm:$0xff]
        %v1402 = vld [vmem:[#allocation5 + $0x1c0] sm:$0xff]
        %v1403 = vld [vmem:[#allocation5 + $0x1c8] sm:$0xff]
        %v1404 = vld [vmem:[#allocation5 + $0x1d0] sm:$0xff]
        %v1405 = vld [vmem:[#allocation5 + $0x1d8] sm:$0xff]
        %v1406 = vld [vmem:[#allocation5 + $0x1e0] sm:$0xff]
        %v1407 = vld [vmem:[#allocation5 + $0x1e8] sm:$0xff]
        %v1408 = vld [vmem:[#allocation5 + $0x1f0] sm:$0xff]
        %v1409 = vld [vmem:[#allocation5 + $0x1f8] sm:$0xff]
        %v1410 = vld [vmem:[#allocation5 + $0x200] sm:$0xff]
        %v1411 = vld [vmem:[#allocation5 + $0x208] sm:$0xff]
        %v1412 = vld [vmem:[#allocation5 + $0x210] sm:$0xff]
        %v1413 = vld [vmem:[#allocation5 + $0x218] sm:$0xff]
        %v1414 = vld [vmem:[#allocation5 + $0x220] sm:$0xff]
        %v1415 = vld [vmem:[#allocation5 + $0x228] sm:$0xff]
        %v1416 = vld [vmem:[#allocation5 + $0x230] sm:$0xff]
        %v1417 = vld [vmem:[#allocation5 + $0x238] sm:$0xff]
        %v1418 = vld [vmem:[#allocation5 + $0x240] sm:$0xff]
        %v1419 = vld [vmem:[#allocation5 + $0x248] sm:$0xff]
        %v1420 = vld [vmem:[#allocation5 + $0x250] sm:$0xff]
        %v1421 = vld [vmem:[#allocation5 + $0x258] sm:$0xff]
        %v1422 = vld [vmem:[#allocation5 + $0x260] sm:$0xff]
        %v1423 = vld [vmem:[#allocation5 + $0x268] sm:$0xff]
        %v1424 = vld [vmem:[#allocation5 + $0x270] sm:$0xff]
        %v1425 = vld [vmem:[#allocation5 + $0x278] sm:$0xff]
        %v1426 = vld [vmem:[#allocation5 + $0x280] sm:$0xff]
        %v1427 = vld [vmem:[#allocation5 + $0x288] sm:$0xff]
        %v1428 = vld [vmem:[#allocation5 + $0x290] sm:$0xff]
        %v1429 = vld [vmem:[#allocation5 + $0x298] sm:$0xff]
        %v1430 = vld [vmem:[#allocation5 + $0x2a0] sm:$0xff]
        %v1431 = vld [vmem:[#allocation5 + $0x2a8] sm:$0xff]
        %v1432 = vld [vmem:[#allocation5 + $0x2b0] sm:$0xff]
        %v1433 = vld [vmem:[#allocation5 + $0x2b8] sm:$0xff]
        %v1434 = vld [vmem:[#allocation5 + $0x2c0] sm:$0xff]
        %v1435 = vld [vmem:[#allocation5 + $0x2c8] sm:$0xff]
        %v1436 = vld [vmem:[#allocation5 + $0x2d0] sm:$0xff]
        %v1437 = vld [vmem:[#allocation5 + $0x2d8] sm:$0xff]
        %v1438 = vld [vmem:[#allocation5 + $0x2e0] sm:$0xff]
        %v1439 = vld [vmem:[#allocation5 + $0x2e8] sm:$0xff]
        %v1440 = vld [vmem:[#allocation5 + $0x2f0] sm:$0xff]
        %v1441 = vld [vmem:[#allocation5 + $0x2f8] sm:$0xff]
        %v1442 = vld [vmem:[#allocation5 + $0x300] sm:$0xff]
        %v1443 = vld [vmem:[#allocation5 + $0x308] sm:$0xff]
        %v1444 = vld [vmem:[#allocation5 + $0x310] sm:$0xff]
        %v1445 = vld [vmem:[#allocation5 + $0x318] sm:$0xff]
        %v1446 = vld [vmem:[#allocation5 + $0x320] sm:$0xff]
        %v1447 = vld [vmem:[#allocation5 + $0x328] sm:$0xff]
        %v1448 = vld [vmem:[#allocation5 + $0x330] sm:$0xff]
        %v1449 = vld [vmem:[#allocation5 + $0x338] sm:$0xff]
        %v1450 = vld [vmem:[#allocation5 + $0x340] sm:$0xff]
        %v1451 = vld [vmem:[#allocation5 + $0x348] sm:$0xff]
        %v1452 = vld [vmem:[#allocation5 + $0x350] sm:$0xff]
        %v1453 = vld [vmem:[#allocation5 + $0x358] sm:$0xff]
        %v1454 = vld [vmem:[#allocation5 + $0x360] sm:$0xff]
        %v1455 = vld [vmem:[#allocation5 + $0x368] sm:$0xff]
        %v1456 = vld [vmem:[#allocation5 + $0x370] sm:$0xff]
        %v1457 = vld [vmem:[#allocation5 + $0x378] sm:$0xff]
        %v1458 = vld [vmem:[#allocation5 + $0x380] sm:$0xff]
        %v1459 = vld [vmem:[#allocation5 + $0x388] sm:$0xff]
        %v1460 = vld [vmem:[#allocation5 + $0x390] sm:$0xff]
        %v1461 = vld [vmem:[#allocation5 + $0x398] sm:$0xff]
        %v1462 = vld [vmem:[#allocation5 + $0x3a0] sm:$0xff]
        %v1463 = vld [vmem:[#allocation5 + $0x3a8] sm:$0xff]
        %v1464 = vld [vmem:[#allocation5 + $0x3b0] sm:$0xff]
        %v1465 = vld [vmem:[#allocation5 + $0x3b8] sm:$0xff]
        %v1466 = vld [vmem:[#allocation5 + $0x3c0] sm:$0xff]
        %v1467 = vld [vmem:[#allocation5 + $0x3c8] sm:$0xff]
        %v1468 = vld [vmem:[#allocation5 + $0x3d0] sm:$0xff]
        %v1469 = vld [vmem:[#allocation5 + $0x3d8] sm:$0xff]
        %v1470 = vld [vmem:[#allocation5 + $0x3e0] sm:$0xff]
        %v1471 = vld [vmem:[#allocation5 + $0x3e8] sm:$0xff]
        %v1472 = vld [vmem:[#allocation5 + $0x3f0] sm:$0xff]
        %v1473 = vld [vmem:[#allocation5 + $0x3f8] sm:$0xff]
        %1474 = vmatprep.subr.mxu0 %v1377
        %1475 = vmatpush1.msra.mxu0 %v1376
        %1476 = vmatprep.subr.mxu0 %v1375
        %1477 = vmatpush1.msra.mxu0 %v1374
        %1478 = vmatprep.subr.mxu0 %v1373
        %1479 = vmatpush1.msra.mxu0 %v1372
        %1480 = vmatprep.subr.mxu0 %v1371
        %1481 = vmatpush1.msra.mxu0 %v1370
        %1482 = vmatprep.subr.mxu0 %v1369
        %1483 = vmatpush1.msra.mxu0 %v1368
        %1484 = vmatprep.subr.mxu0 %v1367
        %1485 = vmatpush1.msra.mxu0 %v1366
        %1486 = vmatprep.subr.mxu0 %v1365
        %1487 = vmatpush1.msra.mxu0 %v1364
        %1488 = vmatprep.subr.mxu0 %v1363
        %1489 = vmatpush1.msra.mxu0 %v1362
        %1490 = vmatprep.subr.mxu0 %v1361
        %1491 = vmatpush1.msra.mxu0 %v1360
        %1492 = vmatprep.subr.mxu0 %v1359
        %1493 = vmatpush1.msra.mxu0 %v1358
        %1494 = vmatprep.subr.mxu0 %v1357
        %1495 = vmatpush1.msra.mxu0 %v1356
        %1496 = vmatprep.subr.mxu0 %v1355
        %1497 = vmatpush1.msra.mxu0 %v1354
        %1498 = vmatprep.subr.mxu0 %v1353
        %1499 = vmatpush1.msra.mxu0 %v1352
        %1500 = vmatprep.subr.mxu0 %v1351
        %1501 = vmatpush1.msra.mxu0 %v1350
        %1502 = vmatprep.subr.mxu0 %v1349
        %1503 = vmatpush1.msra.mxu0 %v1348
        %1504 = vmatprep.subr.mxu0 %v1347
        %1505 = vmatpush1.msra.mxu0 %v1346
        %1506 = vmatprep.subr.mxu0 %v1409
        %1507 = vmatpush2.msra.mxu0 %v1408
        %1508 = vmatprep.subr.mxu0 %v1407
        %1509 = vmatpush2.msra.mxu0 %v1406
        %1510 = vmatprep.subr.mxu0 %v1405
        %1511 = vmatpush2.msra.mxu0 %v1404
        %1512 = vmatprep.subr.mxu0 %v1403
        %1513 = vmatpush2.msra.mxu0 %v1402
        %1514 = vmatprep.subr.mxu0 %v1401
        %1515 = vmatpush2.msra.mxu0 %v1400
        %1516 = vmatprep.subr.mxu0 %v1399
        %1517 = vmatpush2.msra.mxu0 %v1398
        %1518 = vmatprep.subr.mxu0 %v1397
        %1519 = vmatpush2.msra.mxu0 %v1396
        %1520 = vmatprep.subr.mxu0 %v1395
        %1521 = vmatpush2.msra.mxu0 %v1394
        %1522 = vmatprep.subr.mxu0 %v1393
        %1523 = vmatpush2.msra.mxu0 %v1392
        %1524 = vmatprep.subr.mxu0 %v1391
        %1525 = vmatpush2.msra.mxu0 %v1390
        %1526 = vmatprep.subr.mxu0 %v1389
        %1527 = vmatpush2.msra.mxu0 %v1388
        %1528 = vmatprep.subr.mxu0 %v1387
        %1529 = vmatpush2.msra.mxu0 %v1386
        %1530 = vmatprep.subr.mxu0 %v1385
        %1531 = vmatpush2.msra.mxu0 %v1384
        %1532 = vmatprep.subr.mxu0 %v1383
        %1533 = vmatpush2.msra.mxu0 %v1382
        %1534 = vmatprep.subr.mxu0 %v1381
        %1535 = vmatpush2.msra.mxu0 %v1380
        %1536 = vmatprep.subr.mxu0 %v1379
        %1537 = vmatpush2.msra.mxu0 %v1378
        %1538 = vmatprep.mubr.f32.mxu0 %v1327
        %1539 = vmatmul.mubr.f32.gmra.mxu0 %v1326
        %v1540 = vpop.f32.mrf.mxu0
        %v1541 = vadd.f32 0.0, %v1540
        %v1542 = vpop.f32.mrf.mxu0
        %v1543 = vadd.f32 0.0, %v1542
        %1544 = vdwg.mxu0
        %1545 = vmatprep.subr.mxu0 %v1441
        %1546 = vmatpush1.msra.mxu0 %v1440
        %1547 = vmatprep.subr.mxu0 %v1439
        %1548 = vmatpush1.msra.mxu0 %v1438
        %1549 = vmatprep.subr.mxu0 %v1437
        %1550 = vmatpush1.msra.mxu0 %v1436
        %1551 = vmatprep.subr.mxu0 %v1435
        %1552 = vmatpush1.msra.mxu0 %v1434
        %1553 = vmatprep.subr.mxu0 %v1433
        %1554 = vmatpush1.msra.mxu0 %v1432
        %1555 = vmatprep.subr.mxu0 %v1431
        %1556 = vmatpush1.msra.mxu0 %v1430
        %1557 = vmatprep.subr.mxu0 %v1429
        %1558 = vmatpush1.msra.mxu0 %v1428
        %1559 = vmatprep.subr.mxu0 %v1427
        %1560 = vmatpush1.msra.mxu0 %v1426
        %1561 = vmatprep.subr.mxu0 %v1425
        %1562 = vmatpush1.msra.mxu0 %v1424
        %1563 = vmatprep.subr.mxu0 %v1423
        %1564 = vmatpush1.msra.mxu0 %v1422
        %1565 = vmatprep.subr.mxu0 %v1421
        %1566 = vmatpush1.msra.mxu0 %v1420
        %1567 = vmatprep.subr.mxu0 %v1419
        %1568 = vmatpush1.msra.mxu0 %v1418
        %1569 = vmatprep.subr.mxu0 %v1417
        %1570 = vmatpush1.msra.mxu0 %v1416
        %1571 = vmatprep.subr.mxu0 %v1415
        %1572 = vmatpush1.msra.mxu0 %v1414
        %1573 = vmatprep.subr.mxu0 %v1413
        %1574 = vmatpush1.msra.mxu0 %v1412
        %1575 = vmatprep.subr.mxu0 %v1411
        %1576 = vmatpush1.msra.mxu0 %v1410
        %1577 = vmatprep.subr.mxu0 %v1473
        %1578 = vmatpush2.msra.mxu0 %v1472
        %1579 = vmatprep.subr.mxu0 %v1471
        %1580 = vmatpush2.msra.mxu0 %v1470
        %1581 = vmatprep.subr.mxu0 %v1469
        %1582 = vmatpush2.msra.mxu0 %v1468
        %1583 = vmatprep.subr.mxu0 %v1467
        %1584 = vmatpush2.msra.mxu0 %v1466
        %1585 = vmatprep.subr.mxu0 %v1465
        %1586 = vmatpush2.msra.mxu0 %v1464
        %1587 = vmatprep.subr.mxu0 %v1463
        %1588 = vmatpush2.msra.mxu0 %v1462
        %1589 = vmatprep.subr.mxu0 %v1461
        %1590 = vmatpush2.msra.mxu0 %v1460
        %1591 = vmatprep.subr.mxu0 %v1459
        %1592 = vmatpush2.msra.mxu0 %v1458
        %1593 = vmatprep.subr.mxu0 %v1457
        %1594 = vmatpush2.msra.mxu0 %v1456
        %1595 = vmatprep.subr.mxu0 %v1455
        %1596 = vmatpush2.msra.mxu0 %v1454
        %1597 = vmatprep.subr.mxu0 %v1453
        %1598 = vmatpush2.msra.mxu0 %v1452
        %1599 = vmatprep.subr.mxu0 %v1451
        %1600 = vmatpush2.msra.mxu0 %v1450
        %1601 = vmatprep.subr.mxu0 %v1449
        %1602 = vmatpush2.msra.mxu0 %v1448
        %1603 = vmatprep.subr.mxu0 %v1447
        %1604 = vmatpush2.msra.mxu0 %v1446
        %1605 = vmatprep.subr.mxu0 %v1445
        %1606 = vmatpush2.msra.mxu0 %v1444
        %1607 = vmatprep.subr.mxu0 %v1443
        %1608 = vmatpush2.msra.mxu0 %v1442
        %1609 = vmatprep.mubr.f32.mxu0 %v1345
        %1610 = vmatmul.mubr.f32.gmra.mxu0 %v1336
        %v1611 = vpop.f32.mrf.mxu0
        %v1612 = vadd.f32 %v1541, %v1611
        %v1613 = vpop.f32.mrf.mxu0
        %v1614 = vadd.f32 %v1543, %v1613
        %1615 = vdwg.mxu0
        %v1616 = vsub.f32 0.0, %v1612
        %v1617 = vsub.f32 0.0, %v1614
        %v1618 = vmul.f32 %v1616, 1.442695
        %v1619 = vpow.pop %v1618
        %v1620 = vmul.f32 %v1617, 1.442695
        %v1621 = vpow.pop %v1620
        %v1622 = vadd.f32 %v1619, 1.0
        %v1623 = vadd.f32 %v1621, 1.0
        %v1624 = vrcp.pop %v1622
        %v1625 = vmul.f32 1.0, %v1624
        %v1626 = vrcp.pop %v1623
        %v1627 = vmul.f32 1.0, %v1626
        %v1628 = vlaneseq
        %v1629 = vshrl.u32 %v1628, 7
        %v1630 = vsub.s32 0, %v1629
        %v1631 = vrot.slane %v1625, %v1630
        %v1632 = vlaneseq
        %v1633 = vshrl.u32 %v1632, 7
        %v1634 = vsub.s32 0, %v1633
        %v1635 = vrot.slane %v1627, %v1634
        %v1636 = vmul.f32 %v1286, %v1631
        %v1637 = vmul.f32 %v1286, %v1635
        %v1638 = vmul.f32 %v1290, %v1631
        %v1639 = vmul.f32 %v1290, %v1635
        %v1640 = vmul.f32 %v1294, %v1631
        %v1641 = vmul.f32 %v1294, %v1635
        %v1642 = vmul.f32 %v1298, %v1631
        %v1643 = vmul.f32 %v1298, %v1635
        %v1644 = vmul.f32 %v231, %v1636
        %v1645 = vmul.f32 %v232, %v1637
        %v1646 = vmul.f32 %v233, %v1638
        %v1647 = vmul.f32 %v234, %v1639
        %v1648 = vmul.f32 %v235, %v1640
        %v1649 = vmul.f32 %v236, %v1641
        %v1650 = vmul.f32 %v237, %v1642
        %v1651 = vmul.f32 %v238, %v1643
        %1652 = vst [vmem:[%s230] sm:$0xff] %v1644
        %1653 = vst [vmem:[%s230 + $0x8] sm:$0xff] %v1645
        %1654 = vst [vmem:[%s230 + $0x10] sm:$0xff] %v1646
        %1655 = vst [vmem:[%s230 + $0x18] sm:$0xff] %v1647
        %1656 = vst [vmem:[%s230 + $0x20] sm:$0xff] %v1648
        %1657 = vst [vmem:[%s230 + $0x28] sm:$0xff] %v1649
        %1658 = vst [vmem:[%s230 + $0x30] sm:$0xff] %v1650
        %1659 = vst [vmem:[%s230 + $0x38] sm:$0xff] %v1651
        %s1660 = sand.u32 %s119, 1
        %s1661 = scalar_lea.sflag [#allocation4], %s1660
        %s1662 = sand.u32 %s119, 1
        %s1663 = smul.addr %s1662, 64
        %s1664 = scalar_lea.vmem [#allocation7], %s1663
        // Predicated region
        $region45: #{tpu_custom_call.1} parent=35 // pred_check
          %p1665 = pneg %p129
        $region46: #{tpu_custom_call.1} parent=35 // pred_check_branch
          %1667 = sbr.rel (%p1665) target = $region48
        $region47: #{tpu_custom_call.1} parent=35 // pred_region
          %s1669 = ssub.s32 1024, 1024
          %1670 = vsyncadd %s1661, %s1669
          %s1671 = smul.addr %s22, 8
          %s1672 = smul.addr %s1671, 128
          %s1673 = scalar_lea.hbm %s4, %s1672
          %s1674 = sshll.u32 %s1664, 4
          %s1675 = int_to_ptr.vmem [resolvable:$true] %s1674
          %1680 = dma.vmem_to_hbm [thread:$0]  %s1675, 1024, %s1673, %s1661, 256, 256, 16
        $region48: #{tpu_custom_call.1} parent=35 // pred_fallthru
          _
      $region36: #{tpu_custom_call.1} parent=5 // pred_fallthru
        _
      %p1681 = scmp.le.s32.totalorder 2, %s17
      // Predicated region
      $region49: #{tpu_custom_call.1} parent=5 // pred_check
        %p1682 = pneg %p1681
      $region50: #{tpu_custom_call.1} parent=5 // pred_check_branch
        %1684 = sbr.rel (%p1682) target = $region52
      $region51: #{tpu_custom_call.1} parent=5 // pred_region
        %s1685 = ssub.s32 %s17, 2
        // Predicated region
        $region53: #{tpu_custom_call.1} parent=51 // pred_check
          %p1686 = pneg %p135
        $region54: #{tpu_custom_call.1} parent=51 // pred_check_branch
          %1688 = sbr.rel (%p1686) target = $region56
        $region55: #{tpu_custom_call.1} parent=51 // pred_region
          %s1689 = sand.u32 %s120, 1
          %s1690 = scalar_lea.sflag [#allocation4], %s1689
          %s1691 = sand.u32 %s120, 1
          %s1692 = smul.addr %s1691, 64
          %s1693 = scalar_lea.vmem [#allocation7], %s1692
          %1694 = dma.done %s1690, 1024
        $region56: #{tpu_custom_call.1} parent=51 // pred_fallthru
          _
      $region52: #{tpu_custom_call.1} parent=5 // pred_fallthru
        _
    $region6: #{tpu_custom_call.1} parent=1 // loop_footer
      %s21 = sadd.s32 1, %s17
    $region7: #{tpu_custom_call.1} parent=1 // loop_footer_branch
      %16 = sbr.rel target = $region3
    $region8: #{tpu_custom_call.1} parent=1 // loop_exit
      _
    %1695 = vsyncpa [#allocation3], 1
    %s1696 = scalar_lea.sflag [#allocation3], 1
    %1697 = vsyncpa %s1696, 1
    %1698 = vsyncpa [#allocation6], 1
    %1699 = vsyncpa [#allocation4], 1
    %s1700 = scalar_lea.sflag [#allocation4], 1
    %1701 = vsyncpa %s1700, 1

</llo_original>
